<compile_context>
chip_gen: v7x
topology: tpu7x:2x2x1
jax: 0.10.0
libtpu: 0.0.40
codegen_flags: <defaults>
</compile_context>

<pallas_src>
import functools
import math

import jax
import jax.numpy as jnp
from jax.experimental import pallas as pl
from jax.experimental.pallas import tpu as pltpu


# ----------------------------------------------------------------------------
# Pallas kernel: one grid step = `t_block` timesteps of the dual-branch GAT.
# Branches sit on a leading axis of size 2 (0 = crime/"out", 1 = external/"ext").
# ----------------------------------------------------------------------------
def _spatial_gat_kernel(x_ref, xt_ref, w_ref, wt_ref, a_ref, bias_ref, out_ref,
                        *, alpha, nhid, t_block, out_pad):
    """
    x_ref   : (t_block, 2, M, F_pad)     bf16  per-branch node features (zero padded)
    xt_ref  : (t_block, 2, F_pad, M)     bf16  transposed node features
    w_ref   : (t_block, 2, F_pad, nhid)  bf16  per-branch projection
    wt_ref  : (t_block, 2, nhid, F_pad)  bf16  transposed projection
    a_ref   : (t_block, 2, nhid, nhid)   bf16  Q K^T / sqrt(att_dot) per branch
    bias_ref: (M, M)                     bf16  additive adjacency mask (0 / -1e9)
    out_ref : (M, out_lanes)             f32   per-timestep [crime | ext] lane slabs
    """
    M = x_ref.shape[2]

    # Hoisted once (shared by all timesteps / branches): upcast + broadcast the mask.
    bias = jnp.broadcast_to(bias_ref[...].astype(jnp.float32), (2, M, M))

    if out_pad:  # static: compiled away when the output needs no lane padding
        out_ref[...] = jnp.zeros_like(out_ref)

    # t_block is small -> static unroll.
    # TODO(synk): switch to lax.fori_loop(..., unroll=True) + pl.ds stores if t_block > ~8.
    for tt in range(t_block):
        x, xt = x_ref[tt], xt_ref[tt]
        w, wt, a = w_ref[tt], wt_ref[tt], a_ref[tt]

        # Batched (over branch) projections.  h is produced both untransposed and
        # transposed (extra MXU push, zero XLU work) so every matmul below has an
        # untransposed RHS.
        h = jnp.einsum("bmf,bfn->bmn", x, w,
                       preferred_element_type=jnp.float32).astype(jnp.bfloat16)    # (2,M,n)
        h_t = jnp.einsum("bnf,bfm->bnm", wt, xt,
                         preferred_element_type=jnp.float32).astype(jnp.bfloat16)  # (2,n,M)

        # e = (h A) h^T with A = Q K^T / sqrt(att_dot) prepacked on host.
        ha = jnp.einsum("bmn,bnk->bmk", h, a,
                        preferred_element_type=jnp.float32).astype(jnp.bfloat16)   # (2,M,n)
        e = jnp.einsum("bmk,bkn->bmn", ha, h_t,
                       preferred_element_type=jnp.float32)                         # (2,M,M)

        e = jnp.where(e > 0, e, alpha * e)        # LeakyReLU(alpha), f32
        e = e + bias                              # additive mask replaces where(adj>0,...)
        m = jnp.max(e, axis=-1, keepdims=True)    # softmax math stays f32 (v5e-safe)
        p = jnp.exp(e - m)
        s = jnp.sum(p, axis=-1, keepdims=True)
        # rows of attn sum to 1 only to ~bf16 precision (approx recip + bf16 cast);
        # self-loops guarantee s >= 1 so the approx reciprocal is safe.
        attn = (p * pl.reciprocal(s, approx=True)).astype(jnp.bfloat16)
        # TODO(synk): dropout on attention weights (module run here in eval semantics).
        o = jnp.einsum("bmn,bnk->bmk", attn, h,
                       preferred_element_type=jnp.float32)                         # (2,M,n)

        # Store this timestep immediately: bounds live ranges and lets the store slot
        # overlap the next timestep's matmuls.  The HBM writeback of the whole block
        # stays lane-dense (out_lanes is a multiple of 128).
        base = tt * 2 * nhid
        out_ref[:, base:base + nhid] = o[0]              # crime branch
        out_ref[:, base + nhid:base + 2 * nhid] = o[1]   # external branch


# ----------------------------------------------------------------------------
# One-time parameter packing (call once per parameter set, NOT per forward call).
# ----------------------------------------------------------------------------
def pack_spatial_gat_params(params, adj, *, att_dot):
    T, Fh, nhid = params["W_h"].shape
    Ff = params["W_f"].shape[1]
    f_pad = ((max(Fh, Ff) + 7) // 8) * 8      # common per-branch feature width

    def pad_w(w):                              # (T, F, n) -> (T, f_pad, n)
        return jnp.pad(w, ((0, 0), (0, f_pad - w.shape[1]), (0, 0)))

    scale = 1.0 / math.sqrt(float(att_dot))
    a_h = jnp.einsum("tia,tja->tij", params["Q_h"], params["K_h"]) * scale   # (T, n, n)
    a_f = jnp.einsum("tia,tja->tij", params["Q_f"], params["K_f"]) * scale

    w = jnp.stack([pad_w(params["W_h"]), pad_w(params["W_f"])], axis=1)      # (T,2,f_pad,n)
    a = jnp.stack([a_h, a_f], axis=1)                                        # (T,2,n,n)
    bias = jnp.where(adj > 0, 0.0, -1e9)                                     # (M,M)

    return {
        "w": w.astype(jnp.bfloat16),
        "wt": jnp.swapaxes(w, -1, -2).astype(jnp.bfloat16),                  # (T,2,n,f_pad)
        "a": a.astype(jnp.bfloat16),
        "bias": bias.astype(jnp.bfloat16),   # bf16: halves the largest resident DMA
    }


# ----------------------------------------------------------------------------
# Jitted forward: Spatial_Module.forward's per-timestep loop, collapsed.
# ----------------------------------------------------------------------------
@functools.partial(jax.jit, static_argnames=("alpha", "grid_chunks"))
def spatial_gat_forward(x_h, x_f, packed, *, alpha, grid_chunks=1):
    """grid_chunks == 1 (default, recommended on v5e/v6e/v7x at these sizes): the whole
    T loop runs in ONE kernel invocation.  Only raise grid_chunks when (a) per-chunk
    work is well above the ~0.35 us/step pipeline overhead (M = B*N in the hundreds or
    large T) AND (b) t_block*2*nhid per chunk stays a multiple of 128 so the output
    store remains lane-dense; otherwise megacore splitting is a net loss."""
    T, M, Fh = x_h.shape
    Ff = x_f.shape[-1]
    w = packed["w"]
    f_pad, nhid = w.shape[-2], w.shape[-1]
    assert T % grid_chunks == 0
    t_block = T // grid_chunks
    lanes = t_block * 2 * nhid
    out_lanes = ((lanes + 127) // 128) * 128       # guarantee lane-dense output writeback
    out_pad = out_lanes - lanes

    # Per-call feature packing only (cheap, fused under this jit).
    xh = jnp.pad(x_h, ((0, 0), (0, 0), (0, f_pad - Fh)))
    xf = jnp.pad(x_f, ((0, 0), (0, 0), (0, f_pad - Ff)))
    x = jnp.stack([xh, xf], axis=1).astype(jnp.bfloat16)      # (T, 2, M, f_pad)
    xt = jnp.swapaxes(x, -1, -2)                               # (T, 2, f_pad, M)

    kernel = functools.partial(_spatial_gat_kernel, alpha=alpha, nhid=nhid,
                               t_block=t_block, out_pad=out_pad)

    # Advisory cost estimate so XLA schedules around the custom call.
    per_branch_flops = (4 * M * f_pad * nhid          # h and h_T projections
                        + 2 * M * nhid * nhid         # h @ A
                        + 4 * M * M * nhid)           # e and attn @ h
    cost = pl.CostEstimate(
        flops=int(T * 2 * per_branch_flops),
        transcendentals=int(T * 2 * M * M),
        bytes_accessed=int(sum(v.size * v.dtype.itemsize
                               for v in (x, xt, w, packed["wt"], packed["a"], packed["bias"]))
                           + grid_chunks * M * out_lanes * 4),
    )

    out = pl.pallas_call(
        kernel,
        out_shape=jax.ShapeDtypeStruct((grid_chunks, M, out_lanes), jnp.float32),
        grid=(grid_chunks,),
        in_specs=[
            pl.BlockSpec((t_block, 2, M, f_pad), lambda i: (i, 0, 0, 0)),     # x
            pl.BlockSpec((t_block, 2, f_pad, M), lambda i: (i, 0, 0, 0)),     # x^T
            pl.BlockSpec((t_block, 2, f_pad, nhid), lambda i: (i, 0, 0, 0)),  # W
            pl.BlockSpec((t_block, 2, nhid, f_pad), lambda i: (i, 0, 0, 0)),  # W^T
            pl.BlockSpec((t_block, 2, nhid, nhid), lambda i: (i, 0, 0, 0)),   # Q K^T / sqrt(d)
            pl.BlockSpec((M, M), lambda i: (0, 0)),                           # additive bias
        ],
        out_specs=pl.BlockSpec((None, M, out_lanes), lambda i: (i, 0, 0)),
        compiler_params=pltpu.CompilerParams(
            # dimension_semantics is a no-op for a size-1 grid; only pass it when split.
            dimension_semantics=(("parallel",) if grid_chunks > 1 else None),
            vmem_limit_bytes=32 * 1024 * 1024,
        ),
        cost_estimate=cost,
    )(x, xt, w, packed["wt"], packed["a"], packed["bias"])

    # (grid_chunks, M, out_lanes) -> (M, ts, nhid, 2)
    #   == torch.stack([torch.stack((out_t, ext_t), dim=2) for t in range(ts)], dim=1)
    # TODO(synk): the original slices `out[:, -1, :]` of an (externally defined) 3-D GAT
    # output; here each timestep already yields one (M, nhid) tensor per branch.
    out = out[..., :lanes].reshape(grid_chunks, M, t_block, 2, nhid)
    out = jnp.transpose(out, (1, 0, 2, 4, 3)).reshape(M, T, nhid, 2)
    return out


# ----------------------------------------------------------------------------
# Glue mimicking Spatial_Module.forward's data assembly (no file I/O).
# ----------------------------------------------------------------------------
def gen_neighbor_index_zero_with_target(target_region, num_regions):
    # synthetic stand-in: target region first, then its neighbors
    return [target_region] + [r for r in range(num_regions) if r != target_region]


def build_node_features(x_crime_idx, s_crime_idx, x_ext, label, params):
    # label-conditioned embedding of integer crime counts (stand-in for the embedding
    # that GraphAttentionLayer applies after the load_data_GAT() file round-trip).
    x_h = params["emb_crime"][x_crime_idx] + params["emb_side"][s_crime_idx] \
        + params["emb_region_h"][label][None, :, :]
    x_f = x_ext.astype(jnp.float32) + params["emb_region_f"][label][None, :, :]
    return x_h, x_f


if __name__ == "__main__":
    # small shapes consistent with the module
    B, ts = 2, 4
    N = 8                      # target region + neighbors per graph
    M = B * N                  # nodes per timestep graph (B*N, as in feat.view(T, B*N, ...))
    nfeat_hgat, nfeat_fgat = 12, 16
    nhid, att_dot = 16, 8
    alpha = 0.2
    target_region, num_regions = 3, N
    vocab = 32

    key = jax.random.PRNGKey(0)
    ks = jax.random.split(key, 16)

    # deterministic parameters (one GAT layer per timestep -> leading ts axis)
    params = {
        "W_h": 0.1 * jax.random.normal(ks[0], (ts, nfeat_hgat, nhid), jnp.float32),
        "W_f": 0.1 * jax.random.normal(ks[1], (ts, nfeat_fgat, nhid), jnp.float32),
        "Q_h": 0.1 * jax.random.normal(ks[2], (ts, nhid, att_dot), jnp.float32),
        "K_h": 0.1 * jax.random.normal(ks[3], (ts, nhid, att_dot), jnp.float32),
        "Q_f": 0.1 * jax.random.normal(ks[4], (ts, nhid, att_dot), jnp.float32),
        "K_f": 0.1 * jax.random.normal(ks[5], (ts, nhid, att_dot), jnp.float32),
        "emb_crime": 0.1 * jax.random.normal(ks[6], (vocab, nfeat_hgat), jnp.float32),
        "emb_side": 0.1 * jax.random.normal(ks[7], (vocab, nfeat_hgat), jnp.float32),
        "emb_region_h": 0.1 * jax.random.normal(ks[8], (num_regions, nfeat_hgat), jnp.float32),
        "emb_region_f": 0.1 * jax.random.normal(ks[9], (num_regions, nfeat_fgat), jnp.float32),
    }

    # integer inputs (crime counts / side crime / external features), time-major node layout
    x_crime_idx = jax.random.randint(ks[10], (ts, M), 0, vocab)            # (T, B*N)
    s_crime_idx = jax.random.randint(ks[11], (ts, M), 0, vocab)            # (T, B*N)
    x_ext = jax.random.randint(ks[12], (ts, M, nfeat_fgat), 0, 10)         # (T, B*N, nfeat_fgat)

    # region labels (the `label = torch.tensor(reg).repeat(...)` prepend), tiled over batch
    reg = jnp.asarray(gen_neighbor_index_zero_with_target(target_region, num_regions),
                      dtype=jnp.int32)
    label = jnp.tile(reg, (B,))                                            # (B*N,)

    # adjacency: nodes of the same batch-graph are mutually connected (incl. self-loops)
    adj = jnp.kron(jnp.eye(B, dtype=jnp.float32), jnp.ones((N, N), jnp.float32))

    x_h, x_f = build_node_features(x_crime_idx, s_crime_idx, x_ext, label, params)

    # Parameter packing hoisted out of the forward: done ONCE per parameter set.
    packed = pack_spatial_gat_params(params, adj, att_dot=att_dot)
    packed = jax.tree_util.tree_map(jax.block_until_ready, packed)

    # grid_chunks=1: single-invocation kernel (best at these sizes on v5e/v6e/v7x;
    # per-chunk work here is far below the per-grid-step pipeline overhead and
    # splitting would also halve the 128-lane output width).
    spatial_output = spatial_gat_forward(x_h, x_f, packed, alpha=alpha, grid_chunks=1)
    spatial_output = jax.block_until_ready(spatial_output)

    assert spatial_output.shape == (M, ts, nhid, 2)
    assert bool(jnp.all(jnp.isfinite(spatial_output)))
    print("KERNEL_OK")
</pallas_src>

<mosaic_0001>
module attributes {stable_mosaic.version = 11 : i64} {
  func.func @_spatial_gat_kernel(%arg0: i32, %arg1: memref<4x2x16x16xbf16, #tpu.memory_space<vmem>>, %arg2: memref<4x2x16x16xbf16, #tpu.memory_space<vmem>>, %arg3: memref<4x2x16x16xbf16, #tpu.memory_space<vmem>>, %arg4: memref<4x2x16x16xbf16, #tpu.memory_space<vmem>>, %arg5: memref<4x2x16x16xbf16, #tpu.memory_space<vmem>>, %arg6: memref<16x16xbf16, #tpu.memory_space<vmem>>, %arg7: memref<1x16x128xf32, #tpu.memory_space<vmem>>) attributes {dimension_semantics = [#tpu.dimension_semantics<arbitrary>], iteration_bounds = array<i64: 1>, scalar_prefetch = 0 : i64, scratch_operands = 0 : i64, tpu.core_type = #tpu.core_type<tc>, window_params = [{transform_indices = @transform_0, window_bounds = array<i64: 4, 2, 16, 16>}, {transform_indices = @transform_1, window_bounds = array<i64: 4, 2, 16, 16>}, {transform_indices = @transform_2, window_bounds = array<i64: 4, 2, 16, 16>}, {transform_indices = @transform_3, window_bounds = array<i64: 4, 2, 16, 16>}, {transform_indices = @transform_4, window_bounds = array<i64: 4, 2, 16, 16>}, {pipeline_mode = #tpu.pipeline_mode<synchronous>, transform_indices = @transform_5, window_bounds = array<i64: 16, 16>}, {transform_indices = @transform_6, window_bounds = array<i64: 1, 16, 128>}]} {
    %c0 = arith.constant 0 : index
    %c0_0 = arith.constant 0 : index
    %0 = vector.load %arg6[%c0, %c0_0] : memref<16x16xbf16, #tpu.memory_space<vmem>>, vector<16x16xbf16>
    %1 = arith.extf %0 : vector<16x16xbf16> to vector<16x16xf32>
    %2 = vector.shape_cast %1 : vector<16x16xf32> to vector<1x16x16xf32>
    %3 = vector.broadcast %2 : vector<1x16x16xf32> to vector<2x16x16xf32>
    %c0_1 = arith.constant 0 : index
    %c0_2 = arith.constant 0 : index
    %c0_3 = arith.constant 0 : index
    %c0_4 = arith.constant 0 : index
    %4 = vector.load %arg1[%c0_1, %c0_2, %c0_3, %c0_4] : memref<4x2x16x16xbf16, #tpu.memory_space<vmem>>, vector<1x2x16x16xbf16>
    %5 = vector.shape_cast %4 : vector<1x2x16x16xbf16> to vector<2x16x16xbf16>
    %c0_5 = arith.constant 0 : index
    %c0_6 = arith.constant 0 : index
    %c0_7 = arith.constant 0 : index
    %c0_8 = arith.constant 0 : index
    %6 = vector.load %arg2[%c0_5, %c0_6, %c0_7, %c0_8] : memref<4x2x16x16xbf16, #tpu.memory_space<vmem>>, vector<1x2x16x16xbf16>
    %7 = vector.shape_cast %6 : vector<1x2x16x16xbf16> to vector<2x16x16xbf16>
    %c0_9 = arith.constant 0 : index
    %c0_10 = arith.constant 0 : index
    %c0_11 = arith.constant 0 : index
    %c0_12 = arith.constant 0 : index
    %8 = vector.load %arg3[%c0_9, %c0_10, %c0_11, %c0_12] : memref<4x2x16x16xbf16, #tpu.memory_space<vmem>>, vector<1x2x16x16xbf16>
    %9 = vector.shape_cast %8 : vector<1x2x16x16xbf16> to vector<2x16x16xbf16>
    %c0_13 = arith.constant 0 : index
    %c0_14 = arith.constant 0 : index
    %c0_15 = arith.constant 0 : index
    %c0_16 = arith.constant 0 : index
    %10 = vector.load %arg4[%c0_13, %c0_14, %c0_15, %c0_16] : memref<4x2x16x16xbf16, #tpu.memory_space<vmem>>, vector<1x2x16x16xbf16>
    %11 = vector.shape_cast %10 : vector<1x2x16x16xbf16> to vector<2x16x16xbf16>
    %c0_17 = arith.constant 0 : index
    %c0_18 = arith.constant 0 : index
    %c0_19 = arith.constant 0 : index
    %c0_20 = arith.constant 0 : index
    %12 = vector.load %arg5[%c0_17, %c0_18, %c0_19, %c0_20] : memref<4x2x16x16xbf16, #tpu.memory_space<vmem>>, vector<1x2x16x16xbf16>
    %13 = vector.shape_cast %12 : vector<1x2x16x16xbf16> to vector<2x16x16xbf16>
    "tpu.trace_start"() <{level = 10 : i32, message = "bmf,bfn->bmn"}> : () -> ()
    %cst = arith.constant dense<0.000000e+00> : vector<2x16x16xf32>
    %14 = tpu.matmul %5, %9, %cst {dimension_numbers = #tpu.dot_dimension_numbers<[2], [1], [1], [2], [0, 0, 0, 1, 1, 2], [0], [0]>} : vector<2x16x16xbf16>, vector<2x16x16xbf16>, vector<2x16x16xf32> -> vector<2x16x16xf32>
    "tpu.trace_stop"() : () -> ()
    %15 = arith.truncf %14 : vector<2x16x16xf32> to vector<2x16x16xbf16>
    "tpu.trace_start"() <{level = 10 : i32, message = "bnf,bfm->bnm"}> : () -> ()
    %cst_21 = arith.constant dense<0.000000e+00> : vector<2x16x16xf32>
    %16 = tpu.matmul %11, %7, %cst_21 {dimension_numbers = #tpu.dot_dimension_numbers<[2], [1], [1], [2], [0, 0, 0, 1, 1, 2], [0], [0]>} : vector<2x16x16xbf16>, vector<2x16x16xbf16>, vector<2x16x16xf32> -> vector<2x16x16xf32>
    "tpu.trace_stop"() : () -> ()
    %17 = arith.truncf %16 : vector<2x16x16xf32> to vector<2x16x16xbf16>
    "tpu.trace_start"() <{level = 10 : i32, message = "bmn,bnk->bmk"}> : () -> ()
    %cst_22 = arith.constant dense<0.000000e+00> : vector<2x16x16xf32>
    %18 = tpu.matmul %15, %13, %cst_22 {dimension_numbers = #tpu.dot_dimension_numbers<[2], [1], [1], [2], [0, 0, 0, 1, 1, 2], [0], [0]>} : vector<2x16x16xbf16>, vector<2x16x16xbf16>, vector<2x16x16xf32> -> vector<2x16x16xf32>
    "tpu.trace_stop"() : () -> ()
    %19 = arith.truncf %18 : vector<2x16x16xf32> to vector<2x16x16xbf16>
    "tpu.trace_start"() <{level = 10 : i32, message = "bmk,bkn->bmn"}> : () -> ()
    %cst_23 = arith.constant dense<0.000000e+00> : vector<2x16x16xf32>
    %20 = tpu.matmul %19, %17, %cst_23 {dimension_numbers = #tpu.dot_dimension_numbers<[2], [1], [1], [2], [0, 0, 0, 1, 1, 2], [0], [0]>} : vector<2x16x16xbf16>, vector<2x16x16xbf16>, vector<2x16x16xf32> -> vector<2x16x16xf32>
    %cst_24 = arith.constant 0.000000e+00 : f32
    "tpu.trace_stop"() : () -> ()
    %21 = vector.broadcast %cst_24 : f32 to vector<2x16x16xf32>
    %22 = arith.cmpf ogt, %20, %21 : vector<2x16x16xf32>
    %cst_25 = arith.constant 2.000000e-01 : f32
    %23 = vector.broadcast %cst_25 : f32 to vector<2x16x16xf32>
    %24 = arith.mulf %23, %20 : vector<2x16x16xf32>
    %25 = arith.select %22, %20, %24 : vector<2x16x16xi1>, vector<2x16x16xf32>
    %26 = arith.addf %25, %3 : vector<2x16x16xf32>
    %cst_26 = arith.constant dense<0xFF800000> : vector<2x16xf32>
    %27 = vector.multi_reduction <maximumf>, %26, %cst_26 [2] : vector<2x16x16xf32> to vector<2x16xf32>
    %28 = vector.shape_cast %27 : vector<2x16xf32> to vector<2x16x1xf32>
    %29 = vector.broadcast %28 : vector<2x16x1xf32> to vector<2x16x16xf32>
    %30 = arith.subf %26, %29 : vector<2x16x16xf32>
    %31 = math.exp %30 : vector<2x16x16xf32>
    %cst_27 = arith.constant dense<0.000000e+00> : vector<2x16xf32>
    %32 = vector.multi_reduction <add>, %31, %cst_27 [2] : vector<2x16x16xf32> to vector<2x16xf32>
    %33 = vector.shape_cast %32 : vector<2x16xf32> to vector<2x16x1xf32>
    %34 = tpu.reciprocal %33 {approx = true} : vector<2x16x1xf32> -> vector<2x16x1xf32>
    %35 = vector.broadcast %34 : vector<2x16x1xf32> to vector<2x16x16xf32>
    %36 = arith.mulf %31, %35 : vector<2x16x16xf32>
    %37 = arith.truncf %36 : vector<2x16x16xf32> to vector<2x16x16xbf16>
    "tpu.trace_start"() <{level = 10 : i32, message = "bmn,bnk->bmk"}> : () -> ()
    %cst_28 = arith.constant dense<0.000000e+00> : vector<2x16x16xf32>
    %38 = tpu.matmul %37, %15, %cst_28 {dimension_numbers = #tpu.dot_dimension_numbers<[2], [1], [1], [2], [0, 0, 0, 1, 1, 2], [0], [0]>} : vector<2x16x16xbf16>, vector<2x16x16xbf16>, vector<2x16x16xf32> -> vector<2x16x16xf32>
    "tpu.trace_stop"() : () -> ()
    %39 = vector.extract_strided_slice %38 {offsets = [0, 0, 0], sizes = [1, 16, 16], strides = [1, 1, 1]} : vector<2x16x16xf32> to vector<1x16x16xf32>
    %40 = vector.shape_cast %39 : vector<1x16x16xf32> to vector<16x16xf32>
    %c0_29 = arith.constant 0 : index
    %c0_30 = arith.constant 0 : index
    %c0_31 = arith.constant 0 : index
    %41 = vector.load %arg7[%c0_29, %c0_30, %c0_31] : memref<1x16x128xf32, #tpu.memory_space<vmem>>, vector<1x16x16xf32>
    %42 = vector.shape_cast %41 : vector<1x16x16xf32> to vector<16x16xf32>
    %43 = vector.shape_cast %40 : vector<16x16xf32> to vector<1x16x16xf32>
    tpu.vector_store %arg7[%c0_29, %c0_30, %c0_31], %43 {strides = array<i32>} : memref<1x16x128xf32, #tpu.memory_space<vmem>>, vector<1x16x16xf32>,
    %44 = vector.extract_strided_slice %38 {offsets = [1, 0, 0], sizes = [1, 16, 16], strides = [1, 1, 1]} : vector<2x16x16xf32> to vector<1x16x16xf32>
    %45 = vector.shape_cast %44 : vector<1x16x16xf32> to vector<16x16xf32>
    %c0_32 = arith.constant 0 : index
    %c0_33 = arith.constant 0 : index
    %c16 = arith.constant 16 : index
    %46 = vector.load %arg7[%c0_32, %c0_33, %c16] : memref<1x16x128xf32, #tpu.memory_space<vmem>>, vector<1x16x16xf32>
    %47 = vector.shape_cast %46 : vector<1x16x16xf32> to vector<16x16xf32>
    %48 = vector.shape_cast %45 : vector<16x16xf32> to vector<1x16x16xf32>
    tpu.vector_store %arg7[%c0_32, %c0_33, %c16], %48 {strides = array<i32>} : memref<1x16x128xf32, #tpu.memory_space<vmem>>, vector<1x16x16xf32>,
    %c1 = arith.constant 1 : index
    %c0_34 = arith.constant 0 : index
    %c0_35 = arith.constant 0 : index
    %c0_36 = arith.constant 0 : index
    %49 = vector.load %arg1[%c1, %c0_34, %c0_35, %c0_36] : memref<4x2x16x16xbf16, #tpu.memory_space<vmem>>, vector<1x2x16x16xbf16>
    %50 = vector.shape_cast %49 : vector<1x2x16x16xbf16> to vector<2x16x16xbf16>
    %c1_37 = arith.constant 1 : index
    %c0_38 = arith.constant 0 : index
    %c0_39 = arith.constant 0 : index
    %c0_40 = arith.constant 0 : index
    %51 = vector.load %arg2[%c1_37, %c0_38, %c0_39, %c0_40] : memref<4x2x16x16xbf16, #tpu.memory_space<vmem>>, vector<1x2x16x16xbf16>
    %52 = vector.shape_cast %51 : vector<1x2x16x16xbf16> to vector<2x16x16xbf16>
    %c1_41 = arith.constant 1 : index
    %c0_42 = arith.constant 0 : index
    %c0_43 = arith.constant 0 : index
    %c0_44 = arith.constant 0 : index
    %53 = vector.load %arg3[%c1_41, %c0_42, %c0_43, %c0_44] : memref<4x2x16x16xbf16, #tpu.memory_space<vmem>>, vector<1x2x16x16xbf16>
    %54 = vector.shape_cast %53 : vector<1x2x16x16xbf16> to vector<2x16x16xbf16>
    %c1_45 = arith.constant 1 : index
    %c0_46 = arith.constant 0 : index
    %c0_47 = arith.constant 0 : index
    %c0_48 = arith.constant 0 : index
    %55 = vector.load %arg4[%c1_45, %c0_46, %c0_47, %c0_48] : memref<4x2x16x16xbf16, #tpu.memory_space<vmem>>, vector<1x2x16x16xbf16>
    %56 = vector.shape_cast %55 : vector<1x2x16x16xbf16> to vector<2x16x16xbf16>
    %c1_49 = arith.constant 1 : index
    %c0_50 = arith.constant 0 : index
    %c0_51 = arith.constant 0 : index
    %c0_52 = arith.constant 0 : index
    %57 = vector.load %arg5[%c1_49, %c0_50, %c0_51, %c0_52] : memref<4x2x16x16xbf16, #tpu.memory_space<vmem>>, vector<1x2x16x16xbf16>
    %58 = vector.shape_cast %57 : vector<1x2x16x16xbf16> to vector<2x16x16xbf16>
    "tpu.trace_start"() <{level = 10 : i32, message = "bmf,bfn->bmn"}> : () -> ()
    %cst_53 = arith.constant dense<0.000000e+00> : vector<2x16x16xf32>
    %59 = tpu.matmul %50, %54, %cst_53 {dimension_numbers = #tpu.dot_dimension_numbers<[2], [1], [1], [2], [0, 0, 0, 1, 1, 2], [0], [0]>} : vector<2x16x16xbf16>, vector<2x16x16xbf16>, vector<2x16x16xf32> -> vector<2x16x16xf32>
    "tpu.trace_stop"() : () -> ()
    %60 = arith.truncf %59 : vector<2x16x16xf32> to vector<2x16x16xbf16>
    "tpu.trace_start"() <{level = 10 : i32, message = "bnf,bfm->bnm"}> : () -> ()
    %cst_54 = arith.constant dense<0.000000e+00> : vector<2x16x16xf32>
    %61 = tpu.matmul %56, %52, %cst_54 {dimension_numbers = #tpu.dot_dimension_numbers<[2], [1], [1], [2], [0, 0, 0, 1, 1, 2], [0], [0]>} : vector<2x16x16xbf16>, vector<2x16x16xbf16>, vector<2x16x16xf32> -> vector<2x16x16xf32>
    "tpu.trace_stop"() : () -> ()
    %62 = arith.truncf %61 : vector<2x16x16xf32> to vector<2x16x16xbf16>
    "tpu.trace_start"() <{level = 10 : i32, message = "bmn,bnk->bmk"}> : () -> ()
    %cst_55 = arith.constant dense<0.000000e+00> : vector<2x16x16xf32>
    %63 = tpu.matmul %60, %58, %cst_55 {dimension_numbers = #tpu.dot_dimension_numbers<[2], [1], [1], [2], [0, 0, 0, 1, 1, 2], [0], [0]>} : vector<2x16x16xbf16>, vector<2x16x16xbf16>, vector<2x16x16xf32> -> vector<2x16x16xf32>
    "tpu.trace_stop"() : () -> ()
    %64 = arith.truncf %63 : vector<2x16x16xf32> to vector<2x16x16xbf16>
    "tpu.trace_start"() <{level = 10 : i32, message = "bmk,bkn->bmn"}> : () -> ()
    %cst_56 = arith.constant dense<0.000000e+00> : vector<2x16x16xf32>
    %65 = tpu.matmul %64, %62, %cst_56 {dimension_numbers = #tpu.dot_dimension_numbers<[2], [1], [1], [2], [0, 0, 0, 1, 1, 2], [0], [0]>} : vector<2x16x16xbf16>, vector<2x16x16xbf16>, vector<2x16x16xf32> -> vector<2x16x16xf32>
    %cst_57 = arith.constant 0.000000e+00 : f32
    "tpu.trace_stop"() : () -> ()
    %66 = vector.broadcast %cst_57 : f32 to vector<2x16x16xf32>
    %67 = arith.cmpf ogt, %65, %66 : vector<2x16x16xf32>
    %cst_58 = arith.constant 2.000000e-01 : f32
    %68 = vector.broadcast %cst_58 : f32 to vector<2x16x16xf32>
    %69 = arith.mulf %68, %65 : vector<2x16x16xf32>
    %70 = arith.select %67, %65, %69 : vector<2x16x16xi1>, vector<2x16x16xf32>
    %71 = arith.addf %70, %3 : vector<2x16x16xf32>
    %cst_59 = arith.constant dense<0xFF800000> : vector<2x16xf32>
    %72 = vector.multi_reduction <maximumf>, %71, %cst_59 [2] : vector<2x16x16xf32> to vector<2x16xf32>
    %73 = vector.shape_cast %72 : vector<2x16xf32> to vector<2x16x1xf32>
    %74 = vector.broadcast %73 : vector<2x16x1xf32> to vector<2x16x16xf32>
    %75 = arith.subf %71, %74 : vector<2x16x16xf32>
    %76 = math.exp %75 : vector<2x16x16xf32>
    %cst_60 = arith.constant dense<0.000000e+00> : vector<2x16xf32>
    %77 = vector.multi_reduction <add>, %76, %cst_60 [2] : vector<2x16x16xf32> to vector<2x16xf32>
    %78 = vector.shape_cast %77 : vector<2x16xf32> to vector<2x16x1xf32>
    %79 = tpu.reciprocal %78 {approx = true} : vector<2x16x1xf32> -> vector<2x16x1xf32>
    %80 = vector.broadcast %79 : vector<2x16x1xf32> to vector<2x16x16xf32>
    %81 = arith.mulf %76, %80 : vector<2x16x16xf32>
    %82 = arith.truncf %81 : vector<2x16x16xf32> to vector<2x16x16xbf16>
    "tpu.trace_start"() <{level = 10 : i32, message = "bmn,bnk->bmk"}> : () -> ()
    %cst_61 = arith.constant dense<0.000000e+00> : vector<2x16x16xf32>
    %83 = tpu.matmul %82, %60, %cst_61 {dimension_numbers = #tpu.dot_dimension_numbers<[2], [1], [1], [2], [0, 0, 0, 1, 1, 2], [0], [0]>} : vector<2x16x16xbf16>, vector<2x16x16xbf16>, vector<2x16x16xf32> -> vector<2x16x16xf32>
    "tpu.trace_stop"() : () -> ()
    %84 = vector.extract_strided_slice %83 {offsets = [0, 0, 0], sizes = [1, 16, 16], strides = [1, 1, 1]} : vector<2x16x16xf32> to vector<1x16x16xf32>
    %85 = vector.shape_cast %84 : vector<1x16x16xf32> to vector<16x16xf32>
    %c0_62 = arith.constant 0 : index
    %c0_63 = arith.constant 0 : index
    %c32 = arith.constant 32 : index
    %86 = vector.load %arg7[%c0_62, %c0_63, %c32] : memref<1x16x128xf32, #tpu.memory_space<vmem>>, vector<1x16x16xf32>
    %87 = vector.shape_cast %86 : vector<1x16x16xf32> to vector<16x16xf32>
    %88 = vector.shape_cast %85 : vector<16x16xf32> to vector<1x16x16xf32>
    tpu.vector_store %arg7[%c0_62, %c0_63, %c32], %88 {strides = array<i32>} : memref<1x16x128xf32, #tpu.memory_space<vmem>>, vector<1x16x16xf32>,
    %89 = vector.extract_strided_slice %83 {offsets = [1, 0, 0], sizes = [1, 16, 16], strides = [1, 1, 1]} : vector<2x16x16xf32> to vector<1x16x16xf32>
    %90 = vector.shape_cast %89 : vector<1x16x16xf32> to vector<16x16xf32>
    %c0_64 = arith.constant 0 : index
    %c0_65 = arith.constant 0 : index
    %c48 = arith.constant 48 : index
    %91 = vector.load %arg7[%c0_64, %c0_65, %c48] : memref<1x16x128xf32, #tpu.memory_space<vmem>>, vector<1x16x16xf32>
    %92 = vector.shape_cast %91 : vector<1x16x16xf32> to vector<16x16xf32>
    %93 = vector.shape_cast %90 : vector<16x16xf32> to vector<1x16x16xf32>
    tpu.vector_store %arg7[%c0_64, %c0_65, %c48], %93 {strides = array<i32>} : memref<1x16x128xf32, #tpu.memory_space<vmem>>, vector<1x16x16xf32>,
    %c2 = arith.constant 2 : index
    %c0_66 = arith.constant 0 : index
    %c0_67 = arith.constant 0 : index
    %c0_68 = arith.constant 0 : index
    %94 = vector.load %arg1[%c2, %c0_66, %c0_67, %c0_68] : memref<4x2x16x16xbf16, #tpu.memory_space<vmem>>, vector<1x2x16x16xbf16>
    %95 = vector.shape_cast %94 : vector<1x2x16x16xbf16> to vector<2x16x16xbf16>
    %c2_69 = arith.constant 2 : index
    %c0_70 = arith.constant 0 : index
    %c0_71 = arith.constant 0 : index
    %c0_72 = arith.constant 0 : index
    %96 = vector.load %arg2[%c2_69, %c0_70, %c0_71, %c0_72] : memref<4x2x16x16xbf16, #tpu.memory_space<vmem>>, vector<1x2x16x16xbf16>
    %97 = vector.shape_cast %96 : vector<1x2x16x16xbf16> to vector<2x16x16xbf16>
    %c2_73 = arith.constant 2 : index
    %c0_74 = arith.constant 0 : index
    %c0_75 = arith.constant 0 : index
    %c0_76 = arith.constant 0 : index
    %98 = vector.load %arg3[%c2_73, %c0_74, %c0_75, %c0_76] : memref<4x2x16x16xbf16, #tpu.memory_space<vmem>>, vector<1x2x16x16xbf16>
    %99 = vector.shape_cast %98 : vector<1x2x16x16xbf16> to vector<2x16x16xbf16>
    %c2_77 = arith.constant 2 : index
    %c0_78 = arith.constant 0 : index
    %c0_79 = arith.constant 0 : index
    %c0_80 = arith.constant 0 : index
    %100 = vector.load %arg4[%c2_77, %c0_78, %c0_79, %c0_80] : memref<4x2x16x16xbf16, #tpu.memory_space<vmem>>, vector<1x2x16x16xbf16>
    %101 = vector.shape_cast %100 : vector<1x2x16x16xbf16> to vector<2x16x16xbf16>
    %c2_81 = arith.constant 2 : index
    %c0_82 = arith.constant 0 : index
    %c0_83 = arith.constant 0 : index
    %c0_84 = arith.constant 0 : index
    %102 = vector.load %arg5[%c2_81, %c0_82, %c0_83, %c0_84] : memref<4x2x16x16xbf16, #tpu.memory_space<vmem>>, vector<1x2x16x16xbf16>
    %103 = vector.shape_cast %102 : vector<1x2x16x16xbf16> to vector<2x16x16xbf16>
    "tpu.trace_start"() <{level = 10 : i32, message = "bmf,bfn->bmn"}> : () -> ()
    %cst_85 = arith.constant dense<0.000000e+00> : vector<2x16x16xf32>
    %104 = tpu.matmul %95, %99, %cst_85 {dimension_numbers = #tpu.dot_dimension_numbers<[2], [1], [1], [2], [0, 0, 0, 1, 1, 2], [0], [0]>} : vector<2x16x16xbf16>, vector<2x16x16xbf16>, vector<2x16x16xf32> -> vector<2x16x16xf32>
    "tpu.trace_stop"() : () -> ()
    %105 = arith.truncf %104 : vector<2x16x16xf32> to vector<2x16x16xbf16>
    "tpu.trace_start"() <{level = 10 : i32, message = "bnf,bfm->bnm"}> : () -> ()
    %cst_86 = arith.constant dense<0.000000e+00> : vector<2x16x16xf32>
    %106 = tpu.matmul %101, %97, %cst_86 {dimension_numbers = #tpu.dot_dimension_numbers<[2], [1], [1], [2], [0, 0, 0, 1, 1, 2], [0], [0]>} : vector<2x16x16xbf16>, vector<2x16x16xbf16>, vector<2x16x16xf32> -> vector<2x16x16xf32>
    "tpu.trace_stop"() : () -> ()
    %107 = arith.truncf %106 : vector<2x16x16xf32> to vector<2x16x16xbf16>
    "tpu.trace_start"() <{level = 10 : i32, message = "bmn,bnk->bmk"}> : () -> ()
    %cst_87 = arith.constant dense<0.000000e+00> : vector<2x16x16xf32>
    %108 = tpu.matmul %105, %103, %cst_87 {dimension_numbers = #tpu.dot_dimension_numbers<[2], [1], [1], [2], [0, 0, 0, 1, 1, 2], [0], [0]>} : vector<2x16x16xbf16>, vector<2x16x16xbf16>, vector<2x16x16xf32> -> vector<2x16x16xf32>
    "tpu.trace_stop"() : () -> ()
    %109 = arith.truncf %108 : vector<2x16x16xf32> to vector<2x16x16xbf16>
    "tpu.trace_start"() <{level = 10 : i32, message = "bmk,bkn->bmn"}> : () -> ()
    %cst_88 = arith.constant dense<0.000000e+00> : vector<2x16x16xf32>
    %110 = tpu.matmul %109, %107, %cst_88 {dimension_numbers = #tpu.dot_dimension_numbers<[2], [1], [1], [2], [0, 0, 0, 1, 1, 2], [0], [0]>} : vector<2x16x16xbf16>, vector<2x16x16xbf16>, vector<2x16x16xf32> -> vector<2x16x16xf32>
    %cst_89 = arith.constant 0.000000e+00 : f32
    "tpu.trace_stop"() : () -> ()
    %111 = vector.broadcast %cst_89 : f32 to vector<2x16x16xf32>
    %112 = arith.cmpf ogt, %110, %111 : vector<2x16x16xf32>
    %cst_90 = arith.constant 2.000000e-01 : f32
    %113 = vector.broadcast %cst_90 : f32 to vector<2x16x16xf32>
    %114 = arith.mulf %113, %110 : vector<2x16x16xf32>
    %115 = arith.select %112, %110, %114 : vector<2x16x16xi1>, vector<2x16x16xf32>
    %116 = arith.addf %115, %3 : vector<2x16x16xf32>
    %cst_91 = arith.constant dense<0xFF800000> : vector<2x16xf32>
    %117 = vector.multi_reduction <maximumf>, %116, %cst_91 [2] : vector<2x16x16xf32> to vector<2x16xf32>
    %118 = vector.shape_cast %117 : vector<2x16xf32> to vector<2x16x1xf32>
    %119 = vector.broadcast %118 : vector<2x16x1xf32> to vector<2x16x16xf32>
    %120 = arith.subf %116, %119 : vector<2x16x16xf32>
    %121 = math.exp %120 : vector<2x16x16xf32>
    %cst_92 = arith.constant dense<0.000000e+00> : vector<2x16xf32>
    %122 = vector.multi_reduction <add>, %121, %cst_92 [2] : vector<2x16x16xf32> to vector<2x16xf32>
    %123 = vector.shape_cast %122 : vector<2x16xf32> to vector<2x16x1xf32>
    %124 = tpu.reciprocal %123 {approx = true} : vector<2x16x1xf32> -> vector<2x16x1xf32>
    %125 = vector.broadcast %124 : vector<2x16x1xf32> to vector<2x16x16xf32>
    %126 = arith.mulf %121, %125 : vector<2x16x16xf32>
    %127 = arith.truncf %126 : vector<2x16x16xf32> to vector<2x16x16xbf16>
    "tpu.trace_start"() <{level = 10 : i32, message = "bmn,bnk->bmk"}> : () -> ()
    %cst_93 = arith.constant dense<0.000000e+00> : vector<2x16x16xf32>
    %128 = tpu.matmul %127, %105, %cst_93 {dimension_numbers = #tpu.dot_dimension_numbers<[2], [1], [1], [2], [0, 0, 0, 1, 1, 2], [0], [0]>} : vector<2x16x16xbf16>, vector<2x16x16xbf16>, vector<2x16x16xf32> -> vector<2x16x16xf32>
    "tpu.trace_stop"() : () -> ()
    %129 = vector.extract_strided_slice %128 {offsets = [0, 0, 0], sizes = [1, 16, 16], strides = [1, 1, 1]} : vector<2x16x16xf32> to vector<1x16x16xf32>
    %130 = vector.shape_cast %129 : vector<1x16x16xf32> to vector<16x16xf32>
    %c0_94 = arith.constant 0 : index
    %c0_95 = arith.constant 0 : index
    %c64 = arith.constant 64 : index
    %131 = vector.load %arg7[%c0_94, %c0_95, %c64] : memref<1x16x128xf32, #tpu.memory_space<vmem>>, vector<1x16x16xf32>
    %132 = vector.shape_cast %131 : vector<1x16x16xf32> to vector<16x16xf32>
    %133 = vector.shape_cast %130 : vector<16x16xf32> to vector<1x16x16xf32>
    tpu.vector_store %arg7[%c0_94, %c0_95, %c64], %133 {strides = array<i32>} : memref<1x16x128xf32, #tpu.memory_space<vmem>>, vector<1x16x16xf32>,
    %134 = vector.extract_strided_slice %128 {offsets = [1, 0, 0], sizes = [1, 16, 16], strides = [1, 1, 1]} : vector<2x16x16xf32> to vector<1x16x16xf32>
    %135 = vector.shape_cast %134 : vector<1x16x16xf32> to vector<16x16xf32>
    %c0_96 = arith.constant 0 : index
    %c0_97 = arith.constant 0 : index
    %c80 = arith.constant 80 : index
    %136 = vector.load %arg7[%c0_96, %c0_97, %c80] : memref<1x16x128xf32, #tpu.memory_space<vmem>>, vector<1x16x16xf32>
    %137 = vector.shape_cast %136 : vector<1x16x16xf32> to vector<16x16xf32>
    %138 = vector.shape_cast %135 : vector<16x16xf32> to vector<1x16x16xf32>
    tpu.vector_store %arg7[%c0_96, %c0_97, %c80], %138 {strides = array<i32>} : memref<1x16x128xf32, #tpu.memory_space<vmem>>, vector<1x16x16xf32>,
    %c3 = arith.constant 3 : index
    %c0_98 = arith.constant 0 : index
    %c0_99 = arith.constant 0 : index
    %c0_100 = arith.constant 0 : index
    %139 = vector.load %arg1[%c3, %c0_98, %c0_99, %c0_100] : memref<4x2x16x16xbf16, #tpu.memory_space<vmem>>, vector<1x2x16x16xbf16>
    %140 = vector.shape_cast %139 : vector<1x2x16x16xbf16> to vector<2x16x16xbf16>
    %c3_101 = arith.constant 3 : index
    %c0_102 = arith.constant 0 : index
    %c0_103 = arith.constant 0 : index
    %c0_104 = arith.constant 0 : index
    %141 = vector.load %arg2[%c3_101, %c0_102, %c0_103, %c0_104] : memref<4x2x16x16xbf16, #tpu.memory_space<vmem>>, vector<1x2x16x16xbf16>
    %142 = vector.shape_cast %141 : vector<1x2x16x16xbf16> to vector<2x16x16xbf16>
    %c3_105 = arith.constant 3 : index
    %c0_106 = arith.constant 0 : index
    %c0_107 = arith.constant 0 : index
    %c0_108 = arith.constant 0 : index
    %143 = vector.load %arg3[%c3_105, %c0_106, %c0_107, %c0_108] : memref<4x2x16x16xbf16, #tpu.memory_space<vmem>>, vector<1x2x16x16xbf16>
    %144 = vector.shape_cast %143 : vector<1x2x16x16xbf16> to vector<2x16x16xbf16>
    %c3_109 = arith.constant 3 : index
    %c0_110 = arith.constant 0 : index
    %c0_111 = arith.constant 0 : index
    %c0_112 = arith.constant 0 : index
    %145 = vector.load %arg4[%c3_109, %c0_110, %c0_111, %c0_112] : memref<4x2x16x16xbf16, #tpu.memory_space<vmem>>, vector<1x2x16x16xbf16>
    %146 = vector.shape_cast %145 : vector<1x2x16x16xbf16> to vector<2x16x16xbf16>
    %c3_113 = arith.constant 3 : index
    %c0_114 = arith.constant 0 : index
    %c0_115 = arith.constant 0 : index
    %c0_116 = arith.constant 0 : index
    %147 = vector.load %arg5[%c3_113, %c0_114, %c0_115, %c0_116] : memref<4x2x16x16xbf16, #tpu.memory_space<vmem>>, vector<1x2x16x16xbf16>
    %148 = vector.shape_cast %147 : vector<1x2x16x16xbf16> to vector<2x16x16xbf16>
    "tpu.trace_start"() <{level = 10 : i32, message = "bmf,bfn->bmn"}> : () -> ()
    %cst_117 = arith.constant dense<0.000000e+00> : vector<2x16x16xf32>
    %149 = tpu.matmul %140, %144, %cst_117 {dimension_numbers = #tpu.dot_dimension_numbers<[2], [1], [1], [2], [0, 0, 0, 1, 1, 2], [0], [0]>} : vector<2x16x16xbf16>, vector<2x16x16xbf16>, vector<2x16x16xf32> -> vector<2x16x16xf32>
    "tpu.trace_stop"() : () -> ()
    %150 = arith.truncf %149 : vector<2x16x16xf32> to vector<2x16x16xbf16>
    "tpu.trace_start"() <{level = 10 : i32, message = "bnf,bfm->bnm"}> : () -> ()
    %cst_118 = arith.constant dense<0.000000e+00> : vector<2x16x16xf32>
    %151 = tpu.matmul %146, %142, %cst_118 {dimension_numbers = #tpu.dot_dimension_numbers<[2], [1], [1], [2], [0, 0, 0, 1, 1, 2], [0], [0]>} : vector<2x16x16xbf16>, vector<2x16x16xbf16>, vector<2x16x16xf32> -> vector<2x16x16xf32>
    "tpu.trace_stop"() : () -> ()
    %152 = arith.truncf %151 : vector<2x16x16xf32> to vector<2x16x16xbf16>
    "tpu.trace_start"() <{level = 10 : i32, message = "bmn,bnk->bmk"}> : () -> ()
    %cst_119 = arith.constant dense<0.000000e+00> : vector<2x16x16xf32>
    %153 = tpu.matmul %150, %148, %cst_119 {dimension_numbers = #tpu.dot_dimension_numbers<[2], [1], [1], [2], [0, 0, 0, 1, 1, 2], [0], [0]>} : vector<2x16x16xbf16>, vector<2x16x16xbf16>, vector<2x16x16xf32> -> vector<2x16x16xf32>
    "tpu.trace_stop"() : () -> ()
    %154 = arith.truncf %153 : vector<2x16x16xf32> to vector<2x16x16xbf16>
    "tpu.trace_start"() <{level = 10 : i32, message = "bmk,bkn->bmn"}> : () -> ()
    %cst_120 = arith.constant dense<0.000000e+00> : vector<2x16x16xf32>
    %155 = tpu.matmul %154, %152, %cst_120 {dimension_numbers = #tpu.dot_dimension_numbers<[2], [1], [1], [2], [0, 0, 0, 1, 1, 2], [0], [0]>} : vector<2x16x16xbf16>, vector<2x16x16xbf16>, vector<2x16x16xf32> -> vector<2x16x16xf32>
    %cst_121 = arith.constant 0.000000e+00 : f32
    "tpu.trace_stop"() : () -> ()
    %156 = vector.broadcast %cst_121 : f32 to vector<2x16x16xf32>
    %157 = arith.cmpf ogt, %155, %156 : vector<2x16x16xf32>
    %cst_122 = arith.constant 2.000000e-01 : f32
    %158 = vector.broadcast %cst_122 : f32 to vector<2x16x16xf32>
    %159 = arith.mulf %158, %155 : vector<2x16x16xf32>
    %160 = arith.select %157, %155, %159 : vector<2x16x16xi1>, vector<2x16x16xf32>
    %161 = arith.addf %160, %3 : vector<2x16x16xf32>
    %cst_123 = arith.constant dense<0xFF800000> : vector<2x16xf32>
    %162 = vector.multi_reduction <maximumf>, %161, %cst_123 [2] : vector<2x16x16xf32> to vector<2x16xf32>
    %163 = vector.shape_cast %162 : vector<2x16xf32> to vector<2x16x1xf32>
    %164 = vector.broadcast %163 : vector<2x16x1xf32> to vector<2x16x16xf32>
    %165 = arith.subf %161, %164 : vector<2x16x16xf32>
    %166 = math.exp %165 : vector<2x16x16xf32>
    %cst_124 = arith.constant dense<0.000000e+00> : vector<2x16xf32>
    %167 = vector.multi_reduction <add>, %166, %cst_124 [2] : vector<2x16x16xf32> to vector<2x16xf32>
    %168 = vector.shape_cast %167 : vector<2x16xf32> to vector<2x16x1xf32>
    %169 = tpu.reciprocal %168 {approx = true} : vector<2x16x1xf32> -> vector<2x16x1xf32>
    %170 = vector.broadcast %169 : vector<2x16x1xf32> to vector<2x16x16xf32>
    %171 = arith.mulf %166, %170 : vector<2x16x16xf32>
    %172 = arith.truncf %171 : vector<2x16x16xf32> to vector<2x16x16xbf16>
    "tpu.trace_start"() <{level = 10 : i32, message = "bmn,bnk->bmk"}> : () -> ()
    %cst_125 = arith.constant dense<0.000000e+00> : vector<2x16x16xf32>
    %173 = tpu.matmul %172, %150, %cst_125 {dimension_numbers = #tpu.dot_dimension_numbers<[2], [1], [1], [2], [0, 0, 0, 1, 1, 2], [0], [0]>} : vector<2x16x16xbf16>, vector<2x16x16xbf16>, vector<2x16x16xf32> -> vector<2x16x16xf32>
    "tpu.trace_stop"() : () -> ()
    %174 = vector.extract_strided_slice %173 {offsets = [0, 0, 0], sizes = [1, 16, 16], strides = [1, 1, 1]} : vector<2x16x16xf32> to vector<1x16x16xf32>
    %175 = vector.shape_cast %174 : vector<1x16x16xf32> to vector<16x16xf32>
    %c0_126 = arith.constant 0 : index
    %c0_127 = arith.constant 0 : index
    %c96 = arith.constant 96 : index
    %176 = vector.load %arg7[%c0_126, %c0_127, %c96] : memref<1x16x128xf32, #tpu.memory_space<vmem>>, vector<1x16x16xf32>
    %177 = vector.shape_cast %176 : vector<1x16x16xf32> to vector<16x16xf32>
    %178 = vector.shape_cast %175 : vector<16x16xf32> to vector<1x16x16xf32>
    tpu.vector_store %arg7[%c0_126, %c0_127, %c96], %178 {strides = array<i32>} : memref<1x16x128xf32, #tpu.memory_space<vmem>>, vector<1x16x16xf32>,
    %179 = vector.extract_strided_slice %173 {offsets = [1, 0, 0], sizes = [1, 16, 16], strides = [1, 1, 1]} : vector<2x16x16xf32> to vector<1x16x16xf32>
    %180 = vector.shape_cast %179 : vector<1x16x16xf32> to vector<16x16xf32>
    %c0_128 = arith.constant 0 : index
    %c0_129 = arith.constant 0 : index
    %c112 = arith.constant 112 : index
    %181 = vector.load %arg7[%c0_128, %c0_129, %c112] : memref<1x16x128xf32, #tpu.memory_space<vmem>>, vector<1x16x16xf32>
    %182 = vector.shape_cast %181 : vector<1x16x16xf32> to vector<16x16xf32>
    %183 = vector.shape_cast %180 : vector<16x16xf32> to vector<1x16x16xf32>
    tpu.vector_store %arg7[%c0_128, %c0_129, %c112], %183 {strides = array<i32>} : memref<1x16x128xf32, #tpu.memory_space<vmem>>, vector<1x16x16xf32>,
    return
  }
  func.func @transform_0(%arg0: i32) -> (i32, i32, i32, i32) {
    %c0_i32 = arith.constant 0 : i32
    %c0_i32_0 = arith.constant 0 : i32
    %c0_i32_1 = arith.constant 0 : i32
    %c0_i32_2 = arith.constant 0 : i32
    return %arg0, %c0_i32, %c0_i32_0, %c0_i32_1 : i32, i32, i32, i32
  }
  func.func @transform_1(%arg0: i32) -> (i32, i32, i32, i32) {
    %c0_i32 = arith.constant 0 : i32
    %c0_i32_0 = arith.constant 0 : i32
    %c0_i32_1 = arith.constant 0 : i32
    %c0_i32_2 = arith.constant 0 : i32
    return %arg0, %c0_i32, %c0_i32_0, %c0_i32_1 : i32, i32, i32, i32
  }
  func.func @transform_2(%arg0: i32) -> (i32, i32, i32, i32) {
    %c0_i32 = arith.constant 0 : i32
    %c0_i32_0 = arith.constant 0 : i32
    %c0_i32_1 = arith.constant 0 : i32
    %c0_i32_2 = arith.constant 0 : i32
    return %arg0, %c0_i32, %c0_i32_0, %c0_i32_1 : i32, i32, i32, i32
  }
  func.func @transform_3(%arg0: i32) -> (i32, i32, i32, i32) {
    %c0_i32 = arith.constant 0 : i32
    %c0_i32_0 = arith.constant 0 : i32
    %c0_i32_1 = arith.constant 0 : i32
    %c0_i32_2 = arith.constant 0 : i32
    return %arg0, %c0_i32, %c0_i32_0, %c0_i32_1 : i32, i32, i32, i32
  }
  func.func @transform_4(%arg0: i32) -> (i32, i32, i32, i32) {
    %c0_i32 = arith.constant 0 : i32
    %c0_i32_0 = arith.constant 0 : i32
    %c0_i32_1 = arith.constant 0 : i32
    %c0_i32_2 = arith.constant 0 : i32
    return %arg0, %c0_i32, %c0_i32_0, %c0_i32_1 : i32, i32, i32, i32
  }
  func.func @transform_5(%arg0: i32) -> (i32, i32) {
    %c0_i32 = arith.constant 0 : i32
    %c0_i32_0 = arith.constant 0 : i32
    %c0_i32_1 = arith.constant 0 : i32
    return %c0_i32, %c0_i32_0 : i32, i32
  }
  func.func @transform_6(%arg0: i32) -> (i32, i32, i32) {
    %c0_i32 = arith.constant 0 : i32
    %c0_i32_0 = arith.constant 0 : i32
    %c0_i32_1 = arith.constant 0 : i32
    return %arg0, %c0_i32, %c0_i32_0 : i32, i32, i32
  }
}

</mosaic_0001>

<llo_original>
// kernel: spatial_gat_forward.1
$region0: #{spatial_gat_forward.1}
  #allocation0 [shape = 'u32[]', space=smem, size = 0x4, offset = 0x4, fixed_abs, tag = 'smem constant byte address 0x4 - core index']
  #allocation1 [shape = 'u32[144,128]{1,0:T(1,128)}', space=vmem, size = 0x12000, scoped, tag = 'internal scratch']
  %s0 = inlined_call_operand.vmem [shape: bf16[4,2,16,16], index: 0, kind: input, shape index: {}]
  %s1 = inlined_call_operand.vmem [shape: bf16[4,2,16,16], index: 1, kind: input, shape index: {}]
  %s2 = inlined_call_operand.vmem [shape: bf16[4,2,16,16], index: 2, kind: input, shape index: {}]
  %s3 = inlined_call_operand.vmem [shape: bf16[4,2,16,16], index: 3, kind: input, shape index: {}]
  %s4 = inlined_call_operand.vmem [shape: bf16[4,2,16,16], index: 4, kind: input, shape index: {}]
  %s5 = inlined_call_operand.vmem [shape: bf16[16,16], index: 5, kind: input, shape index: {}]
  %s6 = inlined_call_operand.vmem [shape: f32[1,16,128], index: 6, kind: output, shape index: {}]
  %s7 = sld [smem:[#allocation0]]
  $region34: #{spatial_gat_forward.1} parent=0
    _
  %s9 = ssub.s32 1, %s7
  %s10 = scalar_select 0, %s9, %s7
  // Predicated region
  $region2: #{spatial_gat_forward.1} parent=0 // pred_check
    _
  $region3: #{spatial_gat_forward.1} parent=0 // pred_check_branch
    %12 = sbr.rel (0) target = $region5
  $region4: #{spatial_gat_forward.1} parent=0 // pred_region
    _
  $region5: #{spatial_gat_forward.1} parent=0 // pred_fallthru
    _
  // Predicated region
  $region6: #{spatial_gat_forward.1} parent=0 // pred_check
    _
  $region7: #{spatial_gat_forward.1} parent=0 // pred_check_branch
    %14 = sbr.rel (0) target = $region9
  $region8: #{spatial_gat_forward.1} parent=0 // pred_region
    _
  $region9: #{spatial_gat_forward.1} parent=0 // pred_fallthru
    _
  // Predicated region
  $region10: #{spatial_gat_forward.1} parent=0 // pred_check
    _
  $region11: #{spatial_gat_forward.1} parent=0 // pred_check_branch
    %16 = sbr.rel (0) target = $region13
  $region12: #{spatial_gat_forward.1} parent=0 // pred_region
    _
  $region13: #{spatial_gat_forward.1} parent=0 // pred_fallthru
    _
  // Predicated region
  $region14: #{spatial_gat_forward.1} parent=0 // pred_check
    _
  $region15: #{spatial_gat_forward.1} parent=0 // pred_check_branch
    %18 = sbr.rel (0) target = $region17
  $region16: #{spatial_gat_forward.1} parent=0 // pred_region
    _
  $region17: #{spatial_gat_forward.1} parent=0 // pred_fallthru
    _
  // Predicated region
  $region18: #{spatial_gat_forward.1} parent=0 // pred_check
    _
  $region19: #{spatial_gat_forward.1} parent=0 // pred_check_branch
    %20 = sbr.rel (0) target = $region21
  $region20: #{spatial_gat_forward.1} parent=0 // pred_region
    _
  $region21: #{spatial_gat_forward.1} parent=0 // pred_fallthru
    _
  // Predicated region
  $region22: #{spatial_gat_forward.1} parent=0 // pred_check
    _
  $region23: #{spatial_gat_forward.1} parent=0 // pred_check_branch
    %22 = sbr.rel (0) target = $region25
  $region24: #{spatial_gat_forward.1} parent=0 // pred_region
    _
  $region25: #{spatial_gat_forward.1} parent=0 // pred_fallthru
    _
  %v24 = vld [vmem:[%s5] sm:$0xf]
  %v25 = vld [vmem:[%s5 + $0x4] sm:$0xf]
  %v26 = vunpack.c.l.bf16 %v24
  %v27 = vunpack.c.l.bf16 %v25
  %v28 = vld [vmem:[%s0] sm:$0xf]
  %v29 = vld [vmem:[%s0 + $0x4] sm:$0xf]
  %v30 = vld [vmem:[%s0 + $0x8] sm:$0xf]
  %v31 = vld [vmem:[%s0 + $0xc] sm:$0xf]
  %v32 = vld [vmem:[%s1] sm:$0xf]
  %v33 = vld [vmem:[%s1 + $0x4] sm:$0xf]
  %v34 = vld [vmem:[%s1 + $0x8] sm:$0xf]
  %v35 = vld [vmem:[%s1 + $0xc] sm:$0xf]
  %v36 = vld [vmem:[%s2] sm:$0xf]
  %v37 = vld [vmem:[%s2 + $0x4] sm:$0xf]
  %v38 = vld [vmem:[%s2 + $0x8] sm:$0xf]
  %v39 = vld [vmem:[%s2 + $0xc] sm:$0xf]
  %v40 = vld [vmem:[%s3] sm:$0xf]
  %v41 = vld [vmem:[%s3 + $0x4] sm:$0xf]
  %v42 = vld [vmem:[%s3 + $0x8] sm:$0xf]
  %v43 = vld [vmem:[%s3 + $0xc] sm:$0xf]
  %v44 = vld [vmem:[%s4] sm:$0xf]
  %v45 = vld [vmem:[%s4 + $0x4] sm:$0xf]
  %v46 = vld [vmem:[%s4 + $0x8] sm:$0xf]
  %v47 = vld [vmem:[%s4 + $0xc] sm:$0xf]
  %v50 = vunpack.c.l.b16 %v28
  %v51 = vunpack.c.l.b16 %v29
  %v52 = vpack.c.b16 %v51, %v50
  %v55 = vunpack.c.l.b16 %v36
  %v56 = vunpack.c.l.b16 %v37
  %v57 = vpack.c.b16 %v56, %v55
  %vm59 = vcmask 130048
  %v61 = vsel %vm59, %v52, 0
  %63 = vmatprep.subr.bf16.mxu0 0
  %64 = vmatpush1.bf16.msra.mxu0 %v57
  %65 = vmatprep.subr.bf16.mxu0 0
  %66 = vmatpush1.bf16.msra.mxu0 0
  %67 = vmatprep.subr.bf16.mxu0 0
  %68 = vmatpush1.bf16.msra.mxu0 0
  %69 = vmatprep.subr.bf16.mxu0 0
  %70 = vmatpush1.bf16.msra.mxu0 0
  %71 = vmatprep.subr.bf16.mxu0 0
  %72 = vmatpush1.bf16.msra.mxu0 0
  %73 = vmatprep.subr.bf16.mxu0 0
  %74 = vmatpush1.bf16.msra.mxu0 0
  %75 = vmatprep.subr.bf16.mxu0 0
  %76 = vmatpush1.bf16.msra.mxu0 0
  %77 = vmatprep.subr.bf16.mxu0 0
  %78 = vmatpush1.bf16.msra.mxu0 0
  %79 = vmatprep.subr.bf16.mxu0 0
  %80 = vmatpush1.bf16.msra.mxu0 0
  %81 = vmatprep.subr.bf16.mxu0 0
  %82 = vmatpush1.bf16.msra.mxu0 0
  %83 = vmatprep.subr.bf16.mxu0 0
  %84 = vmatpush1.bf16.msra.mxu0 0
  %85 = vmatprep.subr.bf16.mxu0 0
  %86 = vmatpush1.bf16.msra.mxu0 0
  %87 = vmatprep.subr.bf16.mxu0 0
  %88 = vmatpush1.bf16.msra.mxu0 0
  %89 = vmatprep.subr.bf16.mxu0 0
  %90 = vmatpush1.bf16.msra.mxu0 0
  %91 = vmatprep.subr.bf16.mxu0 0
  %92 = vmatpush1.bf16.msra.mxu0 0
  %93 = vmatprep.subr.bf16.mxu0 0
  %94 = vmatpush1.bf16.msra.mxu0 0
  %95 = vmatprep.mubr.bf16.mxu0 0
  %96 = vmatmul.mubr.bf16.gmra.mrb[0].mxu0 %v61
  %v97 = vpop.f32.mrb[0].mxu0
  %v98 = vadd.f32 0.0, %v97
  %v99 = vpop.f32.mrb[0].mxu0
  %v100 = vpop.f32.mrb[0].mxu0
  %v101 = vadd.f32 0.0, %v100
  %v102 = vpop.f32.mrb[0].mxu0
  %103 = vdwg.mxu0
  %v106 = vunpack.c.l.b16 %v30
  %v107 = vunpack.c.l.b16 %v31
  %v108 = vpack.c.b16 %v107, %v106
  %v111 = vunpack.c.l.b16 %v38
  %v112 = vunpack.c.l.b16 %v39
  %v113 = vpack.c.b16 %v112, %v111
  %v116 = vsel %vm59, %v108, 0
  %118 = vmatprep.subr.bf16.mxu0 0
  %119 = vmatpush1.bf16.msra.mxu0 %v113
  %120 = vmatprep.subr.bf16.mxu0 0
  %121 = vmatpush1.bf16.msra.mxu0 0
  %122 = vmatprep.subr.bf16.mxu0 0
  %123 = vmatpush1.bf16.msra.mxu0 0
  %124 = vmatprep.subr.bf16.mxu0 0
  %125 = vmatpush1.bf16.msra.mxu0 0
  %126 = vmatprep.subr.bf16.mxu0 0
  %127 = vmatpush1.bf16.msra.mxu0 0
  %128 = vmatprep.subr.bf16.mxu0 0
  %129 = vmatpush1.bf16.msra.mxu0 0
  %130 = vmatprep.subr.bf16.mxu0 0
  %131 = vmatpush1.bf16.msra.mxu0 0
  %132 = vmatprep.subr.bf16.mxu0 0
  %133 = vmatpush1.bf16.msra.mxu0 0
  %134 = vmatprep.subr.bf16.mxu0 0
  %135 = vmatpush1.bf16.msra.mxu0 0
  %136 = vmatprep.subr.bf16.mxu0 0
  %137 = vmatpush1.bf16.msra.mxu0 0
  %138 = vmatprep.subr.bf16.mxu0 0
  %139 = vmatpush1.bf16.msra.mxu0 0
  %140 = vmatprep.subr.bf16.mxu0 0
  %141 = vmatpush1.bf16.msra.mxu0 0
  %142 = vmatprep.subr.bf16.mxu0 0
  %143 = vmatpush1.bf16.msra.mxu0 0
  %144 = vmatprep.subr.bf16.mxu0 0
  %145 = vmatpush1.bf16.msra.mxu0 0
  %146 = vmatprep.subr.bf16.mxu0 0
  %147 = vmatpush1.bf16.msra.mxu0 0
  %148 = vmatprep.subr.bf16.mxu0 0
  %149 = vmatpush1.bf16.msra.mxu0 0
  %150 = vmatprep.mubr.bf16.mxu0 0
  %151 = vmatmul.mubr.bf16.gmra.mrb[0].mxu0 %v116
  %v152 = vpop.f32.mrb[0].mxu0
  %v153 = vadd.f32 0.0, %v152
  %v154 = vpop.f32.mrb[0].mxu0
  %v155 = vpop.f32.mrb[0].mxu0
  %v156 = vadd.f32 0.0, %v155
  %v157 = vpop.f32.mrb[0].mxu0
  %158 = vdwg.mxu0
  %v159 = vpack.c.bf16 %v101, %v98
  %v160 = vpack.c.bf16 %v156, %v153
  %v163 = vunpack.c.l.b16 %v40
  %v164 = vunpack.c.l.b16 %v41
  %v165 = vpack.c.b16 %v164, %v163
  %v168 = vunpack.c.l.b16 %v32
  %v169 = vunpack.c.l.b16 %v33
  %v170 = vpack.c.b16 %v169, %v168
  %v173 = vsel %vm59, %v165, 0
  %175 = vmatprep.subr.bf16.mxu0 0
  %176 = vmatpush1.bf16.msra.mxu0 %v170
  %177 = vmatprep.subr.bf16.mxu0 0
  %178 = vmatpush1.bf16.msra.mxu0 0
  %179 = vmatprep.subr.bf16.mxu0 0
  %180 = vmatpush1.bf16.msra.mxu0 0
  %181 = vmatprep.subr.bf16.mxu0 0
  %182 = vmatpush1.bf16.msra.mxu0 0
  %183 = vmatprep.subr.bf16.mxu0 0
  %184 = vmatpush1.bf16.msra.mxu0 0
  %185 = vmatprep.subr.bf16.mxu0 0
  %186 = vmatpush1.bf16.msra.mxu0 0
  %187 = vmatprep.subr.bf16.mxu0 0
  %188 = vmatpush1.bf16.msra.mxu0 0
  %189 = vmatprep.subr.bf16.mxu0 0
  %190 = vmatpush1.bf16.msra.mxu0 0
  %191 = vmatprep.subr.bf16.mxu0 0
  %192 = vmatpush1.bf16.msra.mxu0 0
  %193 = vmatprep.subr.bf16.mxu0 0
  %194 = vmatpush1.bf16.msra.mxu0 0
  %195 = vmatprep.subr.bf16.mxu0 0
  %196 = vmatpush1.bf16.msra.mxu0 0
  %197 = vmatprep.subr.bf16.mxu0 0
  %198 = vmatpush1.bf16.msra.mxu0 0
  %199 = vmatprep.subr.bf16.mxu0 0
  %200 = vmatpush1.bf16.msra.mxu0 0
  %201 = vmatprep.subr.bf16.mxu0 0
  %202 = vmatpush1.bf16.msra.mxu0 0
  %203 = vmatprep.subr.bf16.mxu0 0
  %204 = vmatpush1.bf16.msra.mxu0 0
  %205 = vmatprep.subr.bf16.mxu0 0
  %206 = vmatpush1.bf16.msra.mxu0 0
  %207 = vmatprep.mubr.bf16.mxu0 0
  %208 = vmatmul.mubr.bf16.gmra.mrb[0].mxu0 %v173
  %v209 = vpop.f32.mrb[0].mxu0
  %v210 = vadd.f32 0.0, %v209
  %v211 = vpop.f32.mrb[0].mxu0
  %v212 = vpop.f32.mrb[0].mxu0
  %v213 = vadd.f32 0.0, %v212
  %v214 = vpop.f32.mrb[0].mxu0
  %215 = vdwg.mxu0
  %v218 = vunpack.c.l.b16 %v42
  %v219 = vunpack.c.l.b16 %v43
  %v220 = vpack.c.b16 %v219, %v218
  %v223 = vunpack.c.l.b16 %v34
  %v224 = vunpack.c.l.b16 %v35
  %v225 = vpack.c.b16 %v224, %v223
  %v228 = vsel %vm59, %v220, 0
  %230 = vmatprep.subr.bf16.mxu0 0
  %231 = vmatpush1.bf16.msra.mxu0 %v225
  %232 = vmatprep.subr.bf16.mxu0 0
  %233 = vmatpush1.bf16.msra.mxu0 0
  %234 = vmatprep.subr.bf16.mxu0 0
  %235 = vmatpush1.bf16.msra.mxu0 0
  %236 = vmatprep.subr.bf16.mxu0 0
  %237 = vmatpush1.bf16.msra.mxu0 0
  %238 = vmatprep.subr.bf16.mxu0 0
  %239 = vmatpush1.bf16.msra.mxu0 0
  %240 = vmatprep.subr.bf16.mxu0 0
  %241 = vmatpush1.bf16.msra.mxu0 0
  %242 = vmatprep.subr.bf16.mxu0 0
  %243 = vmatpush1.bf16.msra.mxu0 0
  %244 = vmatprep.subr.bf16.mxu0 0
  %245 = vmatpush1.bf16.msra.mxu0 0
  %246 = vmatprep.subr.bf16.mxu0 0
  %247 = vmatpush1.bf16.msra.mxu0 0
  %248 = vmatprep.subr.bf16.mxu0 0
  %249 = vmatpush1.bf16.msra.mxu0 0
  %250 = vmatprep.subr.bf16.mxu0 0
  %251 = vmatpush1.bf16.msra.mxu0 0
  %252 = vmatprep.subr.bf16.mxu0 0
  %253 = vmatpush1.bf16.msra.mxu0 0
  %254 = vmatprep.subr.bf16.mxu0 0
  %255 = vmatpush1.bf16.msra.mxu0 0
  %256 = vmatprep.subr.bf16.mxu0 0
  %257 = vmatpush1.bf16.msra.mxu0 0
  %258 = vmatprep.subr.bf16.mxu0 0
  %259 = vmatpush1.bf16.msra.mxu0 0
  %260 = vmatprep.subr.bf16.mxu0 0
  %261 = vmatpush1.bf16.msra.mxu0 0
  %262 = vmatprep.mubr.bf16.mxu0 0
  %263 = vmatmul.mubr.bf16.gmra.mrb[0].mxu0 %v228
  %v264 = vpop.f32.mrb[0].mxu0
  %v265 = vadd.f32 0.0, %v264
  %v266 = vpop.f32.mrb[0].mxu0
  %v267 = vpop.f32.mrb[0].mxu0
  %v268 = vadd.f32 0.0, %v267
  %v269 = vpop.f32.mrb[0].mxu0
  %270 = vdwg.mxu0
  %v271 = vpack.c.bf16 %v213, %v210
  %v272 = vpack.c.bf16 %v268, %v265
  %v275 = vunpack.c.l.b16 %v44
  %v276 = vunpack.c.l.b16 %v45
  %v277 = vpack.c.b16 %v276, %v275
  %v280 = vsel %vm59, %v159, 0
  %282 = vmatprep.subr.bf16.mxu0 0
  %283 = vmatpush1.bf16.msra.mxu0 %v277
  %284 = vmatprep.subr.bf16.mxu0 0
  %285 = vmatpush1.bf16.msra.mxu0 0
  %286 = vmatprep.subr.bf16.mxu0 0
  %287 = vmatpush1.bf16.msra.mxu0 0
  %288 = vmatprep.subr.bf16.mxu0 0
  %289 = vmatpush1.bf16.msra.mxu0 0
  %290 = vmatprep.subr.bf16.mxu0 0
  %291 = vmatpush1.bf16.msra.mxu0 0
  %292 = vmatprep.subr.bf16.mxu0 0
  %293 = vmatpush1.bf16.msra.mxu0 0
  %294 = vmatprep.subr.bf16.mxu0 0
  %295 = vmatpush1.bf16.msra.mxu0 0
  %296 = vmatprep.subr.bf16.mxu0 0
  %297 = vmatpush1.bf16.msra.mxu0 0
  %298 = vmatprep.subr.bf16.mxu0 0
  %299 = vmatpush1.bf16.msra.mxu0 0
  %300 = vmatprep.subr.bf16.mxu0 0
  %301 = vmatpush1.bf16.msra.mxu0 0
  %302 = vmatprep.subr.bf16.mxu0 0
  %303 = vmatpush1.bf16.msra.mxu0 0
  %304 = vmatprep.subr.bf16.mxu0 0
  %305 = vmatpush1.bf16.msra.mxu0 0
  %306 = vmatprep.subr.bf16.mxu0 0
  %307 = vmatpush1.bf16.msra.mxu0 0
  %308 = vmatprep.subr.bf16.mxu0 0
  %309 = vmatpush1.bf16.msra.mxu0 0
  %310 = vmatprep.subr.bf16.mxu0 0
  %311 = vmatpush1.bf16.msra.mxu0 0
  %312 = vmatprep.subr.bf16.mxu0 0
  %313 = vmatpush1.bf16.msra.mxu0 0
  %314 = vmatprep.mubr.bf16.mxu0 0
  %315 = vmatmul.mubr.bf16.gmra.mrb[0].mxu0 %v280
  %v316 = vpop.f32.mrb[0].mxu0
  %v317 = vadd.f32 0.0, %v316
  %v318 = vpop.f32.mrb[0].mxu0
  %v319 = vpop.f32.mrb[0].mxu0
  %v320 = vadd.f32 0.0, %v319
  %v321 = vpop.f32.mrb[0].mxu0
  %322 = vdwg.mxu0
  %v325 = vunpack.c.l.b16 %v46
  %v326 = vunpack.c.l.b16 %v47
  %v327 = vpack.c.b16 %v326, %v325
  %v330 = vsel %vm59, %v160, 0
  %332 = vmatprep.subr.bf16.mxu0 0
  %333 = vmatpush1.bf16.msra.mxu0 %v327
  %334 = vmatprep.subr.bf16.mxu0 0
  %335 = vmatpush1.bf16.msra.mxu0 0
  %336 = vmatprep.subr.bf16.mxu0 0
  %337 = vmatpush1.bf16.msra.mxu0 0
  %338 = vmatprep.subr.bf16.mxu0 0
  %339 = vmatpush1.bf16.msra.mxu0 0
  %340 = vmatprep.subr.bf16.mxu0 0
  %341 = vmatpush1.bf16.msra.mxu0 0
  %342 = vmatprep.subr.bf16.mxu0 0
  %343 = vmatpush1.bf16.msra.mxu0 0
  %344 = vmatprep.subr.bf16.mxu0 0
  %345 = vmatpush1.bf16.msra.mxu0 0
  %346 = vmatprep.subr.bf16.mxu0 0
  %347 = vmatpush1.bf16.msra.mxu0 0
  %348 = vmatprep.subr.bf16.mxu0 0
  %349 = vmatpush1.bf16.msra.mxu0 0
  %350 = vmatprep.subr.bf16.mxu0 0
  %351 = vmatpush1.bf16.msra.mxu0 0
  %352 = vmatprep.subr.bf16.mxu0 0
  %353 = vmatpush1.bf16.msra.mxu0 0
  %354 = vmatprep.subr.bf16.mxu0 0
  %355 = vmatpush1.bf16.msra.mxu0 0
  %356 = vmatprep.subr.bf16.mxu0 0
  %357 = vmatpush1.bf16.msra.mxu0 0
  %358 = vmatprep.subr.bf16.mxu0 0
  %359 = vmatpush1.bf16.msra.mxu0 0
  %360 = vmatprep.subr.bf16.mxu0 0
  %361 = vmatpush1.bf16.msra.mxu0 0
  %362 = vmatprep.subr.bf16.mxu0 0
  %363 = vmatpush1.bf16.msra.mxu0 0
  %364 = vmatprep.mubr.bf16.mxu0 0
  %365 = vmatmul.mubr.bf16.gmra.mrb[0].mxu0 %v330
  %v366 = vpop.f32.mrb[0].mxu0
  %v367 = vadd.f32 0.0, %v366
  %v368 = vpop.f32.mrb[0].mxu0
  %v369 = vpop.f32.mrb[0].mxu0
  %v370 = vadd.f32 0.0, %v369
  %v371 = vpop.f32.mrb[0].mxu0
  %372 = vdwg.mxu0
  %v373 = vpack.c.bf16 %v320, %v317
  %v374 = vpack.c.bf16 %v370, %v367
  %v376 = vsel %vm59, %v373, 0
  %378 = vmatprep.subr.bf16.mxu0 0
  %379 = vmatpush1.bf16.msra.mxu0 %v271
  %380 = vmatprep.subr.bf16.mxu0 0
  %381 = vmatpush1.bf16.msra.mxu0 0
  %382 = vmatprep.subr.bf16.mxu0 0
  %383 = vmatpush1.bf16.msra.mxu0 0
  %384 = vmatprep.subr.bf16.mxu0 0
  %385 = vmatpush1.bf16.msra.mxu0 0
  %386 = vmatprep.subr.bf16.mxu0 0
  %387 = vmatpush1.bf16.msra.mxu0 0
  %388 = vmatprep.subr.bf16.mxu0 0
  %389 = vmatpush1.bf16.msra.mxu0 0
  %390 = vmatprep.subr.bf16.mxu0 0
  %391 = vmatpush1.bf16.msra.mxu0 0
  %392 = vmatprep.subr.bf16.mxu0 0
  %393 = vmatpush1.bf16.msra.mxu0 0
  %394 = vmatprep.subr.bf16.mxu0 0
  %395 = vmatpush1.bf16.msra.mxu0 0
  %396 = vmatprep.subr.bf16.mxu0 0
  %397 = vmatpush1.bf16.msra.mxu0 0
  %398 = vmatprep.subr.bf16.mxu0 0
  %399 = vmatpush1.bf16.msra.mxu0 0
  %400 = vmatprep.subr.bf16.mxu0 0
  %401 = vmatpush1.bf16.msra.mxu0 0
  %402 = vmatprep.subr.bf16.mxu0 0
  %403 = vmatpush1.bf16.msra.mxu0 0
  %404 = vmatprep.subr.bf16.mxu0 0
  %405 = vmatpush1.bf16.msra.mxu0 0
  %406 = vmatprep.subr.bf16.mxu0 0
  %407 = vmatpush1.bf16.msra.mxu0 0
  %408 = vmatprep.subr.bf16.mxu0 0
  %409 = vmatpush1.bf16.msra.mxu0 0
  %410 = vmatprep.mubr.bf16.mxu0 0
  %411 = vmatmul.mubr.bf16.gmra.mrb[0].mxu0 %v376
  %v412 = vpop.f32.mrb[0].mxu0
  %v413 = vadd.f32 0.0, %v412
  %v414 = vpop.f32.mrb[0].mxu0
  %v415 = vpop.f32.mrb[0].mxu0
  %v416 = vadd.f32 0.0, %v415
  %v417 = vpop.f32.mrb[0].mxu0
  %418 = vdwg.mxu0
  %v420 = vsel %vm59, %v374, 0
  %422 = vmatprep.subr.bf16.mxu0 0
  %423 = vmatpush1.bf16.msra.mxu0 %v272
  %424 = vmatprep.subr.bf16.mxu0 0
  %425 = vmatpush1.bf16.msra.mxu0 0
  %426 = vmatprep.subr.bf16.mxu0 0
  %427 = vmatpush1.bf16.msra.mxu0 0
  %428 = vmatprep.subr.bf16.mxu0 0
  %429 = vmatpush1.bf16.msra.mxu0 0
  %430 = vmatprep.subr.bf16.mxu0 0
  %431 = vmatpush1.bf16.msra.mxu0 0
  %432 = vmatprep.subr.bf16.mxu0 0
  %433 = vmatpush1.bf16.msra.mxu0 0
  %434 = vmatprep.subr.bf16.mxu0 0
  %435 = vmatpush1.bf16.msra.mxu0 0
  %436 = vmatprep.subr.bf16.mxu0 0
  %437 = vmatpush1.bf16.msra.mxu0 0
  %438 = vmatprep.subr.bf16.mxu0 0
  %439 = vmatpush1.bf16.msra.mxu0 0
  %440 = vmatprep.subr.bf16.mxu0 0
  %441 = vmatpush1.bf16.msra.mxu0 0
  %442 = vmatprep.subr.bf16.mxu0 0
  %443 = vmatpush1.bf16.msra.mxu0 0
  %444 = vmatprep.subr.bf16.mxu0 0
  %445 = vmatpush1.bf16.msra.mxu0 0
  %446 = vmatprep.subr.bf16.mxu0 0
  %447 = vmatpush1.bf16.msra.mxu0 0
  %448 = vmatprep.subr.bf16.mxu0 0
  %449 = vmatpush1.bf16.msra.mxu0 0
  %450 = vmatprep.subr.bf16.mxu0 0
  %451 = vmatpush1.bf16.msra.mxu0 0
  %452 = vmatprep.subr.bf16.mxu0 0
  %453 = vmatpush1.bf16.msra.mxu0 0
  %454 = vmatprep.mubr.bf16.mxu0 0
  %455 = vmatmul.mubr.bf16.gmra.mrb[0].mxu0 %v420
  %v456 = vpop.f32.mrb[0].mxu0
  %v457 = vadd.f32 0.0, %v456
  %v458 = vpop.f32.mrb[0].mxu0
  %v459 = vpop.f32.mrb[0].mxu0
  %v460 = vadd.f32 0.0, %v459
  %v461 = vpop.f32.mrb[0].mxu0
  %462 = vdwg.mxu0
  %vm463 = vcmp.gt.f32.partialorder %v413, 0.0
  %vm464 = vcmp.gt.f32.partialorder %v416, 0.0
  %vm465 = vcmp.gt.f32.partialorder %v457, 0.0
  %vm466 = vcmp.gt.f32.partialorder %v460, 0.0
  %v467 = vmul.f32 %v413, 0.2
  %v468 = vmul.f32 %v416, 0.2
  %v469 = vmul.f32 %v457, 0.2
  %v470 = vmul.f32 %v460, 0.2
  %v471 = vsel %vm463, %v413, %v467
  %v472 = vsel %vm464, %v416, %v468
  %v473 = vsel %vm465, %v457, %v469
  %v474 = vsel %vm466, %v460, %v470
  %v475 = vadd.f32 %v471, %v26
  %v476 = vadd.f32 %v472, %v27
  %v477 = vadd.f32 %v473, %v26
  %v478 = vadd.f32 %v474, %v27
  %v479 = vsel %vm59, %v475, -inf
  %480 = vmax.xlane.f32.xlu0 %v479
  %v481 = vpop.xlane.xlu0 %480
  %v482 = vsel %vm59, %v476, -inf
  %483 = vmax.xlane.f32.xlu0 %v482
  %v484 = vpop.xlane.xlu0 %483
  %v485 = vsel %vm59, %v477, -inf
  %486 = vmax.xlane.f32.xlu0 %v485
  %v487 = vpop.xlane.xlu0 %486
  %v488 = vsel %vm59, %v478, -inf
  %489 = vmax.xlane.f32.xlu0 %v488
  %v490 = vpop.xlane.xlu0 %489
  %v491 = vsub.f32 %v475, %v481
  %v492 = vsub.f32 %v476, %v484
  %v493 = vsub.f32 %v477, %v487
  %v494 = vsub.f32 %v478, %v490
  %v495 = vmul.f32 %v491, 1.442695
  %v496 = vpow.pop %v495
  %v497 = vmul.f32 %v492, 1.442695
  %v498 = vpow.pop %v497
  %v499 = vmul.f32 %v493, 1.442695
  %v500 = vpow.pop %v499
  %v501 = vmul.f32 %v494, 1.442695
  %v502 = vpow.pop %v501
  %v503 = vsel %vm59, %v496, 0.0
  %504 = vadd.xlane.f32.xlu0 %v503
  %v505 = vpop.xlane.xlu0 %504
  %v506 = vsel %vm59, %v498, 0.0
  %507 = vadd.xlane.f32.xlu0 %v506
  %v508 = vpop.xlane.xlu0 %507
  %v509 = vsel %vm59, %v500, 0.0
  %510 = vadd.xlane.f32.xlu0 %v509
  %v511 = vpop.xlane.xlu0 %510
  %v512 = vsel %vm59, %v502, 0.0
  %513 = vadd.xlane.f32.xlu0 %v512
  %v514 = vpop.xlane.xlu0 %513
  %v515 = vrcp.pop %v505
  %v516 = vrcp.pop %v508
  %v517 = vrcp.pop %v511
  %v518 = vrcp.pop %v514
  %v519 = vmul.f32 %v496, %v515
  %v520 = vmul.f32 %v498, %v516
  %v521 = vmul.f32 %v500, %v517
  %v522 = vmul.f32 %v502, %v518
  %v523 = vpack.c.bf16 %v520, %v519
  %v524 = vpack.c.bf16 %v522, %v521
  %v526 = vsel %vm59, %v523, 0
  %528 = vmatprep.subr.bf16.mxu0 0
  %529 = vmatpush1.bf16.msra.mxu0 %v159
  %530 = vmatprep.subr.bf16.mxu0 0
  %531 = vmatpush1.bf16.msra.mxu0 0
  %532 = vmatprep.subr.bf16.mxu0 0
  %533 = vmatpush1.bf16.msra.mxu0 0
  %534 = vmatprep.subr.bf16.mxu0 0
  %535 = vmatpush1.bf16.msra.mxu0 0
  %536 = vmatprep.subr.bf16.mxu0 0
  %537 = vmatpush1.bf16.msra.mxu0 0
  %538 = vmatprep.subr.bf16.mxu0 0
  %539 = vmatpush1.bf16.msra.mxu0 0
  %540 = vmatprep.subr.bf16.mxu0 0
  %541 = vmatpush1.bf16.msra.mxu0 0
  %542 = vmatprep.subr.bf16.mxu0 0
  %543 = vmatpush1.bf16.msra.mxu0 0
  %544 = vmatprep.subr.bf16.mxu0 0
  %545 = vmatpush1.bf16.msra.mxu0 0
  %546 = vmatprep.subr.bf16.mxu0 0
  %547 = vmatpush1.bf16.msra.mxu0 0
  %548 = vmatprep.subr.bf16.mxu0 0
  %549 = vmatpush1.bf16.msra.mxu0 0
  %550 = vmatprep.subr.bf16.mxu0 0
  %551 = vmatpush1.bf16.msra.mxu0 0
  %552 = vmatprep.subr.bf16.mxu0 0
  %553 = vmatpush1.bf16.msra.mxu0 0
  %554 = vmatprep.subr.bf16.mxu0 0
  %555 = vmatpush1.bf16.msra.mxu0 0
  %556 = vmatprep.subr.bf16.mxu0 0
  %557 = vmatpush1.bf16.msra.mxu0 0
  %558 = vmatprep.subr.bf16.mxu0 0
  %559 = vmatpush1.bf16.msra.mxu0 0
  %560 = vmatprep.mubr.bf16.mxu0 0
  %561 = vmatmul.mubr.bf16.gmra.mrb[0].mxu0 %v526
  %v562 = vpop.f32.mrb[0].mxu0
  %v563 = vadd.f32 0.0, %v562
  %v564 = vpop.f32.mrb[0].mxu0
  %v565 = vpop.f32.mrb[0].mxu0
  %v566 = vadd.f32 0.0, %v565
  %v567 = vpop.f32.mrb[0].mxu0
  %568 = vdwg.mxu0
  %v570 = vsel %vm59, %v524, 0
  %572 = vmatprep.subr.bf16.mxu0 0
  %573 = vmatpush1.bf16.msra.mxu0 %v160
  %574 = vmatprep.subr.bf16.mxu0 0
  %575 = vmatpush1.bf16.msra.mxu0 0
  %576 = vmatprep.subr.bf16.mxu0 0
  %577 = vmatpush1.bf16.msra.mxu0 0
  %578 = vmatprep.subr.bf16.mxu0 0
  %579 = vmatpush1.bf16.msra.mxu0 0
  %580 = vmatprep.subr.bf16.mxu0 0
  %581 = vmatpush1.bf16.msra.mxu0 0
  %582 = vmatprep.subr.bf16.mxu0 0
  %583 = vmatpush1.bf16.msra.mxu0 0
  %584 = vmatprep.subr.bf16.mxu0 0
  %585 = vmatpush1.bf16.msra.mxu0 0
  %586 = vmatprep.subr.bf16.mxu0 0
  %587 = vmatpush1.bf16.msra.mxu0 0
  %588 = vmatprep.subr.bf16.mxu0 0
  %589 = vmatpush1.bf16.msra.mxu0 0
  %590 = vmatprep.subr.bf16.mxu0 0
  %591 = vmatpush1.bf16.msra.mxu0 0
  %592 = vmatprep.subr.bf16.mxu0 0
  %593 = vmatpush1.bf16.msra.mxu0 0
  %594 = vmatprep.subr.bf16.mxu0 0
  %595 = vmatpush1.bf16.msra.mxu0 0
  %596 = vmatprep.subr.bf16.mxu0 0
  %597 = vmatpush1.bf16.msra.mxu0 0
  %598 = vmatprep.subr.bf16.mxu0 0
  %599 = vmatpush1.bf16.msra.mxu0 0
  %600 = vmatprep.subr.bf16.mxu0 0
  %601 = vmatpush1.bf16.msra.mxu0 0
  %602 = vmatprep.subr.bf16.mxu0 0
  %603 = vmatpush1.bf16.msra.mxu0 0
  %604 = vmatprep.mubr.bf16.mxu0 0
  %605 = vmatmul.mubr.bf16.gmra.mrb[0].mxu0 %v570
  %v606 = vpop.f32.mrb[0].mxu0
  %v607 = vadd.f32 0.0, %v606
  %v608 = vpop.f32.mrb[0].mxu0
  %v609 = vpop.f32.mrb[0].mxu0
  %v610 = vadd.f32 0.0, %v609
  %v611 = vpop.f32.mrb[0].mxu0
  %612 = vdwg.mxu0
  %613 = vst.msk [vmem:[%s6] sm:$0xff] %vm59, %v563
  %614 = vst.msk [vmem:[%s6 + $0x8] sm:$0xff] %vm59, %v566
  %617 = vrot.lane.b32.xlu0 %v607, 16
  %v618 = vpop.permute.xlu0 %617
  %619 = vrot.lane.b32.xlu0 %v610, 16
  %v620 = vpop.permute.xlu0 %619
  %vm623 = vcmask 261248
  %624 = vst.msk [vmem:[%s6] sm:$0xff] %vm623, %v618
  %625 = vst.msk [vmem:[%s6 + $0x8] sm:$0xff] %vm623, %v620
  %s626 = scalar_lea.vmem %s0, 16
  %v627 = vld [vmem:[%s626] sm:$0xf]
  %v628 = vld [vmem:[%s626 + $0x4] sm:$0xf]
  %v629 = vld [vmem:[%s626 + $0x8] sm:$0xf]
  %v630 = vld [vmem:[%s626 + $0xc] sm:$0xf]
  %s631 = scalar_lea.vmem %s1, 16
  %v632 = vld [vmem:[%s631] sm:$0xf]
  %v633 = vld [vmem:[%s631 + $0x4] sm:$0xf]
  %v634 = vld [vmem:[%s631 + $0x8] sm:$0xf]
  %v635 = vld [vmem:[%s631 + $0xc] sm:$0xf]
  %s636 = scalar_lea.vmem %s2, 16
  %v637 = vld [vmem:[%s636] sm:$0xf]
  %v638 = vld [vmem:[%s636 + $0x4] sm:$0xf]
  %v639 = vld [vmem:[%s636 + $0x8] sm:$0xf]
  %v640 = vld [vmem:[%s636 + $0xc] sm:$0xf]
  %s641 = scalar_lea.vmem %s3, 16
  %v642 = vld [vmem:[%s641] sm:$0xf]
  %v643 = vld [vmem:[%s641 + $0x4] sm:$0xf]
  %v644 = vld [vmem:[%s641 + $0x8] sm:$0xf]
  %v645 = vld [vmem:[%s641 + $0xc] sm:$0xf]
  %s646 = scalar_lea.vmem %s4, 16
  %v647 = vld [vmem:[%s646] sm:$0xf]
  %v648 = vld [vmem:[%s646 + $0x4] sm:$0xf]
  %v649 = vld [vmem:[%s646 + $0x8] sm:$0xf]
  %v650 = vld [vmem:[%s646 + $0xc] sm:$0xf]
  %v653 = vunpack.c.l.b16 %v627
  %v654 = vunpack.c.l.b16 %v628
  %v655 = vpack.c.b16 %v654, %v653
  %v658 = vunpack.c.l.b16 %v637
  %v659 = vunpack.c.l.b16 %v638
  %v660 = vpack.c.b16 %v659, %v658
  %v663 = vsel %vm59, %v655, 0
  %665 = vmatprep.subr.bf16.mxu0 0
  %666 = vmatpush1.bf16.msra.mxu0 %v660
  %667 = vmatprep.subr.bf16.mxu0 0
  %668 = vmatpush1.bf16.msra.mxu0 0
  %669 = vmatprep.subr.bf16.mxu0 0
  %670 = vmatpush1.bf16.msra.mxu0 0
  %671 = vmatprep.subr.bf16.mxu0 0
  %672 = vmatpush1.bf16.msra.mxu0 0
  %673 = vmatprep.subr.bf16.mxu0 0
  %674 = vmatpush1.bf16.msra.mxu0 0
  %675 = vmatprep.subr.bf16.mxu0 0
  %676 = vmatpush1.bf16.msra.mxu0 0
  %677 = vmatprep.subr.bf16.mxu0 0
  %678 = vmatpush1.bf16.msra.mxu0 0
  %679 = vmatprep.subr.bf16.mxu0 0
  %680 = vmatpush1.bf16.msra.mxu0 0
  %681 = vmatprep.subr.bf16.mxu0 0
  %682 = vmatpush1.bf16.msra.mxu0 0
  %683 = vmatprep.subr.bf16.mxu0 0
  %684 = vmatpush1.bf16.msra.mxu0 0
  %685 = vmatprep.subr.bf16.mxu0 0
  %686 = vmatpush1.bf16.msra.mxu0 0
  %687 = vmatprep.subr.bf16.mxu0 0
  %688 = vmatpush1.bf16.msra.mxu0 0
  %689 = vmatprep.subr.bf16.mxu0 0
  %690 = vmatpush1.bf16.msra.mxu0 0
  %691 = vmatprep.subr.bf16.mxu0 0
  %692 = vmatpush1.bf16.msra.mxu0 0
  %693 = vmatprep.subr.bf16.mxu0 0
  %694 = vmatpush1.bf16.msra.mxu0 0
  %695 = vmatprep.subr.bf16.mxu0 0
  %696 = vmatpush1.bf16.msra.mxu0 0
  %697 = vmatprep.mubr.bf16.mxu0 0
  %698 = vmatmul.mubr.bf16.gmra.mrb[0].mxu0 %v663
  %v699 = vpop.f32.mrb[0].mxu0
  %v700 = vadd.f32 0.0, %v699
  %v701 = vpop.f32.mrb[0].mxu0
  %v702 = vpop.f32.mrb[0].mxu0
  %v703 = vadd.f32 0.0, %v702
  %v704 = vpop.f32.mrb[0].mxu0
  %705 = vdwg.mxu0
  %v708 = vunpack.c.l.b16 %v629
  %v709 = vunpack.c.l.b16 %v630
  %v710 = vpack.c.b16 %v709, %v708
  %v713 = vunpack.c.l.b16 %v639
  %v714 = vunpack.c.l.b16 %v640
  %v715 = vpack.c.b16 %v714, %v713
  %v718 = vsel %vm59, %v710, 0
  %720 = vmatprep.subr.bf16.mxu0 0
  %721 = vmatpush1.bf16.msra.mxu0 %v715
  %722 = vmatprep.subr.bf16.mxu0 0
  %723 = vmatpush1.bf16.msra.mxu0 0
  %724 = vmatprep.subr.bf16.mxu0 0
  %725 = vmatpush1.bf16.msra.mxu0 0
  %726 = vmatprep.subr.bf16.mxu0 0
  %727 = vmatpush1.bf16.msra.mxu0 0
  %728 = vmatprep.subr.bf16.mxu0 0
  %729 = vmatpush1.bf16.msra.mxu0 0
  %730 = vmatprep.subr.bf16.mxu0 0
  %731 = vmatpush1.bf16.msra.mxu0 0
  %732 = vmatprep.subr.bf16.mxu0 0
  %733 = vmatpush1.bf16.msra.mxu0 0
  %734 = vmatprep.subr.bf16.mxu0 0
  %735 = vmatpush1.bf16.msra.mxu0 0
  %736 = vmatprep.subr.bf16.mxu0 0
  %737 = vmatpush1.bf16.msra.mxu0 0
  %738 = vmatprep.subr.bf16.mxu0 0
  %739 = vmatpush1.bf16.msra.mxu0 0
  %740 = vmatprep.subr.bf16.mxu0 0
  %741 = vmatpush1.bf16.msra.mxu0 0
  %742 = vmatprep.subr.bf16.mxu0 0
  %743 = vmatpush1.bf16.msra.mxu0 0
  %744 = vmatprep.subr.bf16.mxu0 0
  %745 = vmatpush1.bf16.msra.mxu0 0
  %746 = vmatprep.subr.bf16.mxu0 0
  %747 = vmatpush1.bf16.msra.mxu0 0
  %748 = vmatprep.subr.bf16.mxu0 0
  %749 = vmatpush1.bf16.msra.mxu0 0
  %750 = vmatprep.subr.bf16.mxu0 0
  %751 = vmatpush1.bf16.msra.mxu0 0
  %752 = vmatprep.mubr.bf16.mxu0 0
  %753 = vmatmul.mubr.bf16.gmra.mrb[0].mxu0 %v718
  %v754 = vpop.f32.mrb[0].mxu0
  %v755 = vadd.f32 0.0, %v754
  %v756 = vpop.f32.mrb[0].mxu0
  %v757 = vpop.f32.mrb[0].mxu0
  %v758 = vadd.f32 0.0, %v757
  %v759 = vpop.f32.mrb[0].mxu0
  %760 = vdwg.mxu0
  %v761 = vpack.c.bf16 %v703, %v700
  %v762 = vpack.c.bf16 %v758, %v755
  %v765 = vunpack.c.l.b16 %v642
  %v766 = vunpack.c.l.b16 %v643
  %v767 = vpack.c.b16 %v766, %v765
  %v770 = vunpack.c.l.b16 %v632
  %v771 = vunpack.c.l.b16 %v633
  %v772 = vpack.c.b16 %v771, %v770
  %v775 = vsel %vm59, %v767, 0
  %777 = vmatprep.subr.bf16.mxu0 0
  %778 = vmatpush1.bf16.msra.mxu0 %v772
  %779 = vmatprep.subr.bf16.mxu0 0
  %780 = vmatpush1.bf16.msra.mxu0 0
  %781 = vmatprep.subr.bf16.mxu0 0
  %782 = vmatpush1.bf16.msra.mxu0 0
  %783 = vmatprep.subr.bf16.mxu0 0
  %784 = vmatpush1.bf16.msra.mxu0 0
  %785 = vmatprep.subr.bf16.mxu0 0
  %786 = vmatpush1.bf16.msra.mxu0 0
  %787 = vmatprep.subr.bf16.mxu0 0
  %788 = vmatpush1.bf16.msra.mxu0 0
  %789 = vmatprep.subr.bf16.mxu0 0
  %790 = vmatpush1.bf16.msra.mxu0 0
  %791 = vmatprep.subr.bf16.mxu0 0
  %792 = vmatpush1.bf16.msra.mxu0 0
  %793 = vmatprep.subr.bf16.mxu0 0
  %794 = vmatpush1.bf16.msra.mxu0 0
  %795 = vmatprep.subr.bf16.mxu0 0
  %796 = vmatpush1.bf16.msra.mxu0 0
  %797 = vmatprep.subr.bf16.mxu0 0
  %798 = vmatpush1.bf16.msra.mxu0 0
  %799 = vmatprep.subr.bf16.mxu0 0
  %800 = vmatpush1.bf16.msra.mxu0 0
  %801 = vmatprep.subr.bf16.mxu0 0
  %802 = vmatpush1.bf16.msra.mxu0 0
  %803 = vmatprep.subr.bf16.mxu0 0
  %804 = vmatpush1.bf16.msra.mxu0 0
  %805 = vmatprep.subr.bf16.mxu0 0
  %806 = vmatpush1.bf16.msra.mxu0 0
  %807 = vmatprep.subr.bf16.mxu0 0
  %808 = vmatpush1.bf16.msra.mxu0 0
  %809 = vmatprep.mubr.bf16.mxu0 0
  %810 = vmatmul.mubr.bf16.gmra.mrb[0].mxu0 %v775
  %v811 = vpop.f32.mrb[0].mxu0
  %v812 = vadd.f32 0.0, %v811
  %v813 = vpop.f32.mrb[0].mxu0
  %v814 = vpop.f32.mrb[0].mxu0
  %v815 = vadd.f32 0.0, %v814
  %v816 = vpop.f32.mrb[0].mxu0
  %817 = vdwg.mxu0
  %v820 = vunpack.c.l.b16 %v644
  %v821 = vunpack.c.l.b16 %v645
  %v822 = vpack.c.b16 %v821, %v820
  %v825 = vunpack.c.l.b16 %v634
  %v826 = vunpack.c.l.b16 %v635
  %v827 = vpack.c.b16 %v826, %v825
  %v830 = vsel %vm59, %v822, 0
  %832 = vmatprep.subr.bf16.mxu0 0
  %833 = vmatpush1.bf16.msra.mxu0 %v827
  %834 = vmatprep.subr.bf16.mxu0 0
  %835 = vmatpush1.bf16.msra.mxu0 0
  %836 = vmatprep.subr.bf16.mxu0 0
  %837 = vmatpush1.bf16.msra.mxu0 0
  %838 = vmatprep.subr.bf16.mxu0 0
  %839 = vmatpush1.bf16.msra.mxu0 0
  %840 = vmatprep.subr.bf16.mxu0 0
  %841 = vmatpush1.bf16.msra.mxu0 0
  %842 = vmatprep.subr.bf16.mxu0 0
  %843 = vmatpush1.bf16.msra.mxu0 0
  %844 = vmatprep.subr.bf16.mxu0 0
  %845 = vmatpush1.bf16.msra.mxu0 0
  %846 = vmatprep.subr.bf16.mxu0 0
  %847 = vmatpush1.bf16.msra.mxu0 0
  %848 = vmatprep.subr.bf16.mxu0 0
  %849 = vmatpush1.bf16.msra.mxu0 0
  %850 = vmatprep.subr.bf16.mxu0 0
  %851 = vmatpush1.bf16.msra.mxu0 0
  %852 = vmatprep.subr.bf16.mxu0 0
  %853 = vmatpush1.bf16.msra.mxu0 0
  %854 = vmatprep.subr.bf16.mxu0 0
  %855 = vmatpush1.bf16.msra.mxu0 0
  %856 = vmatprep.subr.bf16.mxu0 0
  %857 = vmatpush1.bf16.msra.mxu0 0
  %858 = vmatprep.subr.bf16.mxu0 0
  %859 = vmatpush1.bf16.msra.mxu0 0
  %860 = vmatprep.subr.bf16.mxu0 0
  %861 = vmatpush1.bf16.msra.mxu0 0
  %862 = vmatprep.subr.bf16.mxu0 0
  %863 = vmatpush1.bf16.msra.mxu0 0
  %864 = vmatprep.mubr.bf16.mxu0 0
  %865 = vmatmul.mubr.bf16.gmra.mrb[0].mxu0 %v830
  %v866 = vpop.f32.mrb[0].mxu0
  %v867 = vadd.f32 0.0, %v866
  %v868 = vpop.f32.mrb[0].mxu0
  %v869 = vpop.f32.mrb[0].mxu0
  %v870 = vadd.f32 0.0, %v869
  %v871 = vpop.f32.mrb[0].mxu0
  %872 = vdwg.mxu0
  %v873 = vpack.c.bf16 %v815, %v812
  %v874 = vpack.c.bf16 %v870, %v867
  %v877 = vunpack.c.l.b16 %v647
  %v878 = vunpack.c.l.b16 %v648
  %v879 = vpack.c.b16 %v878, %v877
  %v882 = vsel %vm59, %v761, 0
  %884 = vmatprep.subr.bf16.mxu0 0
  %885 = vmatpush1.bf16.msra.mxu0 %v879
  %886 = vmatprep.subr.bf16.mxu0 0
  %887 = vmatpush1.bf16.msra.mxu0 0
  %888 = vmatprep.subr.bf16.mxu0 0
  %889 = vmatpush1.bf16.msra.mxu0 0
  %890 = vmatprep.subr.bf16.mxu0 0
  %891 = vmatpush1.bf16.msra.mxu0 0
  %892 = vmatprep.subr.bf16.mxu0 0
  %893 = vmatpush1.bf16.msra.mxu0 0
  %894 = vmatprep.subr.bf16.mxu0 0
  %895 = vmatpush1.bf16.msra.mxu0 0
  %896 = vmatprep.subr.bf16.mxu0 0
  %897 = vmatpush1.bf16.msra.mxu0 0
  %898 = vmatprep.subr.bf16.mxu0 0
  %899 = vmatpush1.bf16.msra.mxu0 0
  %900 = vmatprep.subr.bf16.mxu0 0
  %901 = vmatpush1.bf16.msra.mxu0 0
  %902 = vmatprep.subr.bf16.mxu0 0
  %903 = vmatpush1.bf16.msra.mxu0 0
  %904 = vmatprep.subr.bf16.mxu0 0
  %905 = vmatpush1.bf16.msra.mxu0 0
  %906 = vmatprep.subr.bf16.mxu0 0
  %907 = vmatpush1.bf16.msra.mxu0 0
  %908 = vmatprep.subr.bf16.mxu0 0
  %909 = vmatpush1.bf16.msra.mxu0 0
  %910 = vmatprep.subr.bf16.mxu0 0
  %911 = vmatpush1.bf16.msra.mxu0 0
  %912 = vmatprep.subr.bf16.mxu0 0
  %913 = vmatpush1.bf16.msra.mxu0 0
  %914 = vmatprep.subr.bf16.mxu0 0
  %915 = vmatpush1.bf16.msra.mxu0 0
  %916 = vmatprep.mubr.bf16.mxu0 0
  %917 = vmatmul.mubr.bf16.gmra.mrb[0].mxu0 %v882
  %v918 = vpop.f32.mrb[0].mxu0
  %v919 = vadd.f32 0.0, %v918
  %v920 = vpop.f32.mrb[0].mxu0
  %v921 = vpop.f32.mrb[0].mxu0
  %v922 = vadd.f32 0.0, %v921
  %v923 = vpop.f32.mrb[0].mxu0
  %924 = vdwg.mxu0
  %v927 = vunpack.c.l.b16 %v649
  %v928 = vunpack.c.l.b16 %v650
  %v929 = vpack.c.b16 %v928, %v927
  %v932 = vsel %vm59, %v762, 0
  %934 = vmatprep.subr.bf16.mxu0 0
  %935 = vmatpush1.bf16.msra.mxu0 %v929
  %936 = vmatprep.subr.bf16.mxu0 0
  %937 = vmatpush1.bf16.msra.mxu0 0
  %938 = vmatprep.subr.bf16.mxu0 0
  %939 = vmatpush1.bf16.msra.mxu0 0
  %940 = vmatprep.subr.bf16.mxu0 0
  %941 = vmatpush1.bf16.msra.mxu0 0
  %942 = vmatprep.subr.bf16.mxu0 0
  %943 = vmatpush1.bf16.msra.mxu0 0
  %944 = vmatprep.subr.bf16.mxu0 0
  %945 = vmatpush1.bf16.msra.mxu0 0
  %946 = vmatprep.subr.bf16.mxu0 0
  %947 = vmatpush1.bf16.msra.mxu0 0
  %948 = vmatprep.subr.bf16.mxu0 0
  %949 = vmatpush1.bf16.msra.mxu0 0
  %950 = vmatprep.subr.bf16.mxu0 0
  %951 = vmatpush1.bf16.msra.mxu0 0
  %952 = vmatprep.subr.bf16.mxu0 0
  %953 = vmatpush1.bf16.msra.mxu0 0
  %954 = vmatprep.subr.bf16.mxu0 0
  %955 = vmatpush1.bf16.msra.mxu0 0
  %956 = vmatprep.subr.bf16.mxu0 0
  %957 = vmatpush1.bf16.msra.mxu0 0
  %958 = vmatprep.subr.bf16.mxu0 0
  %959 = vmatpush1.bf16.msra.mxu0 0
  %960 = vmatprep.subr.bf16.mxu0 0
  %961 = vmatpush1.bf16.msra.mxu0 0
  %962 = vmatprep.subr.bf16.mxu0 0
  %963 = vmatpush1.bf16.msra.mxu0 0
  %964 = vmatprep.subr.bf16.mxu0 0
  %965 = vmatpush1.bf16.msra.mxu0 0
  %966 = vmatprep.mubr.bf16.mxu0 0
  %967 = vmatmul.mubr.bf16.gmra.mrb[0].mxu0 %v932
  %v968 = vpop.f32.mrb[0].mxu0
  %v969 = vadd.f32 0.0, %v968
  %v970 = vpop.f32.mrb[0].mxu0
  %v971 = vpop.f32.mrb[0].mxu0
  %v972 = vadd.f32 0.0, %v971
  %v973 = vpop.f32.mrb[0].mxu0
  %974 = vdwg.mxu0
  %v975 = vpack.c.bf16 %v922, %v919
  %v976 = vpack.c.bf16 %v972, %v969
  %v978 = vsel %vm59, %v975, 0
  %980 = vmatprep.subr.bf16.mxu0 0
  %981 = vmatpush1.bf16.msra.mxu0 %v873
  %982 = vmatprep.subr.bf16.mxu0 0
  %983 = vmatpush1.bf16.msra.mxu0 0
  %984 = vmatprep.subr.bf16.mxu0 0
  %985 = vmatpush1.bf16.msra.mxu0 0
  %986 = vmatprep.subr.bf16.mxu0 0
  %987 = vmatpush1.bf16.msra.mxu0 0
  %988 = vmatprep.subr.bf16.mxu0 0
  %989 = vmatpush1.bf16.msra.mxu0 0
  %990 = vmatprep.subr.bf16.mxu0 0
  %991 = vmatpush1.bf16.msra.mxu0 0
  %992 = vmatprep.subr.bf16.mxu0 0
  %993 = vmatpush1.bf16.msra.mxu0 0
  %994 = vmatprep.subr.bf16.mxu0 0
  %995 = vmatpush1.bf16.msra.mxu0 0
  %996 = vmatprep.subr.bf16.mxu0 0
  %997 = vmatpush1.bf16.msra.mxu0 0
  %998 = vmatprep.subr.bf16.mxu0 0
  %999 = vmatpush1.bf16.msra.mxu0 0
  %1000 = vmatprep.subr.bf16.mxu0 0
  %1001 = vmatpush1.bf16.msra.mxu0 0
  %1002 = vmatprep.subr.bf16.mxu0 0
  %1003 = vmatpush1.bf16.msra.mxu0 0
  %1004 = vmatprep.subr.bf16.mxu0 0
  %1005 = vmatpush1.bf16.msra.mxu0 0
  %1006 = vmatprep.subr.bf16.mxu0 0
  %1007 = vmatpush1.bf16.msra.mxu0 0
  %1008 = vmatprep.subr.bf16.mxu0 0
  %1009 = vmatpush1.bf16.msra.mxu0 0
  %1010 = vmatprep.subr.bf16.mxu0 0
  %1011 = vmatpush1.bf16.msra.mxu0 0
  %1012 = vmatprep.mubr.bf16.mxu0 0
  %1013 = vmatmul.mubr.bf16.gmra.mrb[0].mxu0 %v978
  %v1014 = vpop.f32.mrb[0].mxu0
  %v1015 = vadd.f32 0.0, %v1014
  %v1016 = vpop.f32.mrb[0].mxu0
  %v1017 = vpop.f32.mrb[0].mxu0
  %v1018 = vadd.f32 0.0, %v1017
  %v1019 = vpop.f32.mrb[0].mxu0
  %1020 = vdwg.mxu0
  %v1022 = vsel %vm59, %v976, 0
  %1024 = vmatprep.subr.bf16.mxu0 0
  %1025 = vmatpush1.bf16.msra.mxu0 %v874
  %1026 = vmatprep.subr.bf16.mxu0 0
  %1027 = vmatpush1.bf16.msra.mxu0 0
  %1028 = vmatprep.subr.bf16.mxu0 0
  %1029 = vmatpush1.bf16.msra.mxu0 0
  %1030 = vmatprep.subr.bf16.mxu0 0
  %1031 = vmatpush1.bf16.msra.mxu0 0
  %1032 = vmatprep.subr.bf16.mxu0 0
  %1033 = vmatpush1.bf16.msra.mxu0 0
  %1034 = vmatprep.subr.bf16.mxu0 0
  %1035 = vmatpush1.bf16.msra.mxu0 0
  %1036 = vmatprep.subr.bf16.mxu0 0
  %1037 = vmatpush1.bf16.msra.mxu0 0
  %1038 = vmatprep.subr.bf16.mxu0 0
  %1039 = vmatpush1.bf16.msra.mxu0 0
  %1040 = vmatprep.subr.bf16.mxu0 0
  %1041 = vmatpush1.bf16.msra.mxu0 0
  %1042 = vmatprep.subr.bf16.mxu0 0
  %1043 = vmatpush1.bf16.msra.mxu0 0
  %1044 = vmatprep.subr.bf16.mxu0 0
  %1045 = vmatpush1.bf16.msra.mxu0 0
  %1046 = vmatprep.subr.bf16.mxu0 0
  %1047 = vmatpush1.bf16.msra.mxu0 0
  %1048 = vmatprep.subr.bf16.mxu0 0
  %1049 = vmatpush1.bf16.msra.mxu0 0
  %1050 = vmatprep.subr.bf16.mxu0 0
  %1051 = vmatpush1.bf16.msra.mxu0 0
  %1052 = vmatprep.subr.bf16.mxu0 0
  %1053 = vmatpush1.bf16.msra.mxu0 0
  %1054 = vmatprep.subr.bf16.mxu0 0
  %1055 = vmatpush1.bf16.msra.mxu0 0
  %1056 = vmatprep.mubr.bf16.mxu0 0
  %1057 = vmatmul.mubr.bf16.gmra.mrb[0].mxu0 %v1022
  %v1058 = vpop.f32.mrb[0].mxu0
  %v1059 = vadd.f32 0.0, %v1058
  %v1060 = vpop.f32.mrb[0].mxu0
  %v1061 = vpop.f32.mrb[0].mxu0
  %v1062 = vadd.f32 0.0, %v1061
  %v1063 = vpop.f32.mrb[0].mxu0
  %1064 = vdwg.mxu0
  %vm1065 = vcmp.gt.f32.partialorder %v1015, 0.0
  %vm1066 = vcmp.gt.f32.partialorder %v1018, 0.0
  %vm1067 = vcmp.gt.f32.partialorder %v1059, 0.0
  %vm1068 = vcmp.gt.f32.partialorder %v1062, 0.0
  %v1069 = vmul.f32 %v1015, 0.2
  %v1070 = vmul.f32 %v1018, 0.2
  %v1071 = vmul.f32 %v1059, 0.2
  %v1072 = vmul.f32 %v1062, 0.2
  %v1073 = vsel %vm1065, %v1015, %v1069
  %v1074 = vsel %vm1066, %v1018, %v1070
  %v1075 = vsel %vm1067, %v1059, %v1071
  %v1076 = vsel %vm1068, %v1062, %v1072
  %v1077 = vadd.f32 %v1073, %v26
  %v1078 = vadd.f32 %v1074, %v27
  %v1079 = vadd.f32 %v1075, %v26
  %v1080 = vadd.f32 %v1076, %v27
  %v1081 = vsel %vm59, %v1077, -inf
  %1082 = vmax.xlane.f32.xlu0 %v1081
  %v1083 = vpop.xlane.xlu0 %1082
  %v1084 = vsel %vm59, %v1078, -inf
  %1085 = vmax.xlane.f32.xlu0 %v1084
  %v1086 = vpop.xlane.xlu0 %1085
  %v1087 = vsel %vm59, %v1079, -inf
  %1088 = vmax.xlane.f32.xlu0 %v1087
  %v1089 = vpop.xlane.xlu0 %1088
  %v1090 = vsel %vm59, %v1080, -inf
  %1091 = vmax.xlane.f32.xlu0 %v1090
  %v1092 = vpop.xlane.xlu0 %1091
  %v1093 = vsub.f32 %v1077, %v1083
  %v1094 = vsub.f32 %v1078, %v1086
  %v1095 = vsub.f32 %v1079, %v1089
  %v1096 = vsub.f32 %v1080, %v1092
  %v1097 = vmul.f32 %v1093, 1.442695
  %v1098 = vpow.pop %v1097
  %v1099 = vmul.f32 %v1094, 1.442695
  %v1100 = vpow.pop %v1099
  %v1101 = vmul.f32 %v1095, 1.442695
  %v1102 = vpow.pop %v1101
  %v1103 = vmul.f32 %v1096, 1.442695
  %v1104 = vpow.pop %v1103
  %v1105 = vsel %vm59, %v1098, 0.0
  %1106 = vadd.xlane.f32.xlu0 %v1105
  %v1107 = vpop.xlane.xlu0 %1106
  %v1108 = vsel %vm59, %v1100, 0.0
  %1109 = vadd.xlane.f32.xlu0 %v1108
  %v1110 = vpop.xlane.xlu0 %1109
  %v1111 = vsel %vm59, %v1102, 0.0
  %1112 = vadd.xlane.f32.xlu0 %v1111
  %v1113 = vpop.xlane.xlu0 %1112
  %v1114 = vsel %vm59, %v1104, 0.0
  %1115 = vadd.xlane.f32.xlu0 %v1114
  %v1116 = vpop.xlane.xlu0 %1115
  %v1117 = vrcp.pop %v1107
  %v1118 = vrcp.pop %v1110
  %v1119 = vrcp.pop %v1113
  %v1120 = vrcp.pop %v1116
  %v1121 = vmul.f32 %v1098, %v1117
  %v1122 = vmul.f32 %v1100, %v1118
  %v1123 = vmul.f32 %v1102, %v1119
  %v1124 = vmul.f32 %v1104, %v1120
  %v1125 = vpack.c.bf16 %v1122, %v1121
  %v1126 = vpack.c.bf16 %v1124, %v1123
  %v1128 = vsel %vm59, %v1125, 0
  %1130 = vmatprep.subr.bf16.mxu0 0
  %1131 = vmatpush1.bf16.msra.mxu0 %v761
  %1132 = vmatprep.subr.bf16.mxu0 0
  %1133 = vmatpush1.bf16.msra.mxu0 0
  %1134 = vmatprep.subr.bf16.mxu0 0
  %1135 = vmatpush1.bf16.msra.mxu0 0
  %1136 = vmatprep.subr.bf16.mxu0 0
  %1137 = vmatpush1.bf16.msra.mxu0 0
  %1138 = vmatprep.subr.bf16.mxu0 0
  %1139 = vmatpush1.bf16.msra.mxu0 0
  %1140 = vmatprep.subr.bf16.mxu0 0
  %1141 = vmatpush1.bf16.msra.mxu0 0
  %1142 = vmatprep.subr.bf16.mxu0 0
  %1143 = vmatpush1.bf16.msra.mxu0 0
  %1144 = vmatprep.subr.bf16.mxu0 0
  %1145 = vmatpush1.bf16.msra.mxu0 0
  %1146 = vmatprep.subr.bf16.mxu0 0
  %1147 = vmatpush1.bf16.msra.mxu0 0
  %1148 = vmatprep.subr.bf16.mxu0 0
  %1149 = vmatpush1.bf16.msra.mxu0 0
  %1150 = vmatprep.subr.bf16.mxu0 0
  %1151 = vmatpush1.bf16.msra.mxu0 0
  %1152 = vmatprep.subr.bf16.mxu0 0
  %1153 = vmatpush1.bf16.msra.mxu0 0
  %1154 = vmatprep.subr.bf16.mxu0 0
  %1155 = vmatpush1.bf16.msra.mxu0 0
  %1156 = vmatprep.subr.bf16.mxu0 0
  %1157 = vmatpush1.bf16.msra.mxu0 0
  %1158 = vmatprep.subr.bf16.mxu0 0
  %1159 = vmatpush1.bf16.msra.mxu0 0
  %1160 = vmatprep.subr.bf16.mxu0 0
  %1161 = vmatpush1.bf16.msra.mxu0 0
  %1162 = vmatprep.mubr.bf16.mxu0 0
  %1163 = vmatmul.mubr.bf16.gmra.mrb[0].mxu0 %v1128
  %v1164 = vpop.f32.mrb[0].mxu0
  %v1165 = vadd.f32 0.0, %v1164
  %v1166 = vpop.f32.mrb[0].mxu0
  %v1167 = vpop.f32.mrb[0].mxu0
  %v1168 = vadd.f32 0.0, %v1167
  %v1169 = vpop.f32.mrb[0].mxu0
  %1170 = vdwg.mxu0
  %v1172 = vsel %vm59, %v1126, 0
  %1174 = vmatprep.subr.bf16.mxu0 0
  %1175 = vmatpush1.bf16.msra.mxu0 %v762
  %1176 = vmatprep.subr.bf16.mxu0 0
  %1177 = vmatpush1.bf16.msra.mxu0 0
  %1178 = vmatprep.subr.bf16.mxu0 0
  %1179 = vmatpush1.bf16.msra.mxu0 0
  %1180 = vmatprep.subr.bf16.mxu0 0
  %1181 = vmatpush1.bf16.msra.mxu0 0
  %1182 = vmatprep.subr.bf16.mxu0 0
  %1183 = vmatpush1.bf16.msra.mxu0 0
  %1184 = vmatprep.subr.bf16.mxu0 0
  %1185 = vmatpush1.bf16.msra.mxu0 0
  %1186 = vmatprep.subr.bf16.mxu0 0
  %1187 = vmatpush1.bf16.msra.mxu0 0
  %1188 = vmatprep.subr.bf16.mxu0 0
  %1189 = vmatpush1.bf16.msra.mxu0 0
  %1190 = vmatprep.subr.bf16.mxu0 0
  %1191 = vmatpush1.bf16.msra.mxu0 0
  %1192 = vmatprep.subr.bf16.mxu0 0
  %1193 = vmatpush1.bf16.msra.mxu0 0
  %1194 = vmatprep.subr.bf16.mxu0 0
  %1195 = vmatpush1.bf16.msra.mxu0 0
  %1196 = vmatprep.subr.bf16.mxu0 0
  %1197 = vmatpush1.bf16.msra.mxu0 0
  %1198 = vmatprep.subr.bf16.mxu0 0
  %1199 = vmatpush1.bf16.msra.mxu0 0
  %1200 = vmatprep.subr.bf16.mxu0 0
  %1201 = vmatpush1.bf16.msra.mxu0 0
  %1202 = vmatprep.subr.bf16.mxu0 0
  %1203 = vmatpush1.bf16.msra.mxu0 0
  %1204 = vmatprep.subr.bf16.mxu0 0
  %1205 = vmatpush1.bf16.msra.mxu0 0
  %1206 = vmatprep.mubr.bf16.mxu0 0
  %1207 = vmatmul.mubr.bf16.gmra.mrb[0].mxu0 %v1172
  %v1208 = vpop.f32.mrb[0].mxu0
  %v1209 = vadd.f32 0.0, %v1208
  %v1210 = vpop.f32.mrb[0].mxu0
  %v1211 = vpop.f32.mrb[0].mxu0
  %v1212 = vadd.f32 0.0, %v1211
  %v1213 = vpop.f32.mrb[0].mxu0
  %1214 = vdwg.mxu0
  %1217 = vrot.lane.b32.xlu0 %v1165, 32
  %v1218 = vpop.permute.xlu0 %1217
  %1219 = vrot.lane.b32.xlu0 %v1168, 32
  %v1220 = vpop.permute.xlu0 %1219
  %vm1223 = vcmask 392448
  %1224 = vst.msk [vmem:[%s6] sm:$0xff] %vm1223, %v1218
  %1225 = vst.msk [vmem:[%s6 + $0x8] sm:$0xff] %vm1223, %v1220
  %1228 = vrot.lane.b32.xlu0 %v1209, 48
  %v1229 = vpop.permute.xlu0 %1228
  %1230 = vrot.lane.b32.xlu0 %v1212, 48
  %v1231 = vpop.permute.xlu0 %1230
  %vm1234 = vcmask 523648
  %1235 = vst.msk [vmem:[%s6] sm:$0xff] %vm1234, %v1229
  %1236 = vst.msk [vmem:[%s6 + $0x8] sm:$0xff] %vm1234, %v1231
  %s1237 = scalar_lea.vmem %s0, 32
  %v1238 = vld [vmem:[%s1237] sm:$0xf]
  %v1239 = vld [vmem:[%s1237 + $0x4] sm:$0xf]
  %v1240 = vld [vmem:[%s1237 + $0x8] sm:$0xf]
  %v1241 = vld [vmem:[%s1237 + $0xc] sm:$0xf]
  %s1242 = scalar_lea.vmem %s1, 32
  %v1243 = vld [vmem:[%s1242] sm:$0xf]
  %v1244 = vld [vmem:[%s1242 + $0x4] sm:$0xf]
  %v1245 = vld [vmem:[%s1242 + $0x8] sm:$0xf]
  %v1246 = vld [vmem:[%s1242 + $0xc] sm:$0xf]
  %s1247 = scalar_lea.vmem %s2, 32
  %v1248 = vld [vmem:[%s1247] sm:$0xf]
  %v1249 = vld [vmem:[%s1247 + $0x4] sm:$0xf]
  %v1250 = vld [vmem:[%s1247 + $0x8] sm:$0xf]
  %v1251 = vld [vmem:[%s1247 + $0xc] sm:$0xf]
  %s1252 = scalar_lea.vmem %s3, 32
  %v1253 = vld [vmem:[%s1252] sm:$0xf]
  %v1254 = vld [vmem:[%s1252 + $0x4] sm:$0xf]
  %v1255 = vld [vmem:[%s1252 + $0x8] sm:$0xf]
  %v1256 = vld [vmem:[%s1252 + $0xc] sm:$0xf]
  %s1257 = scalar_lea.vmem %s4, 32
  %v1258 = vld [vmem:[%s1257] sm:$0xf]
  %v1259 = vld [vmem:[%s1257 + $0x4] sm:$0xf]
  %v1260 = vld [vmem:[%s1257 + $0x8] sm:$0xf]
  %v1261 = vld [vmem:[%s1257 + $0xc] sm:$0xf]
  %v1264 = vunpack.c.l.b16 %v1238
  %v1265 = vunpack.c.l.b16 %v1239
  %v1266 = vpack.c.b16 %v1265, %v1264
  %v1269 = vunpack.c.l.b16 %v1248
  %v1270 = vunpack.c.l.b16 %v1249
  %v1271 = vpack.c.b16 %v1270, %v1269
  %v1274 = vsel %vm59, %v1266, 0
  %1276 = vmatprep.subr.bf16.mxu0 0
  %1277 = vmatpush1.bf16.msra.mxu0 %v1271
  %1278 = vmatprep.subr.bf16.mxu0 0
  %1279 = vmatpush1.bf16.msra.mxu0 0
  %1280 = vmatprep.subr.bf16.mxu0 0
  %1281 = vmatpush1.bf16.msra.mxu0 0
  %1282 = vmatprep.subr.bf16.mxu0 0
  %1283 = vmatpush1.bf16.msra.mxu0 0
  %1284 = vmatprep.subr.bf16.mxu0 0
  %1285 = vmatpush1.bf16.msra.mxu0 0
  %1286 = vmatprep.subr.bf16.mxu0 0
  %1287 = vmatpush1.bf16.msra.mxu0 0
  %1288 = vmatprep.subr.bf16.mxu0 0
  %1289 = vmatpush1.bf16.msra.mxu0 0
  %1290 = vmatprep.subr.bf16.mxu0 0
  %1291 = vmatpush1.bf16.msra.mxu0 0
  %1292 = vmatprep.subr.bf16.mxu0 0
  %1293 = vmatpush1.bf16.msra.mxu0 0
  %1294 = vmatprep.subr.bf16.mxu0 0
  %1295 = vmatpush1.bf16.msra.mxu0 0
  %1296 = vmatprep.subr.bf16.mxu0 0
  %1297 = vmatpush1.bf16.msra.mxu0 0
  %1298 = vmatprep.subr.bf16.mxu0 0
  %1299 = vmatpush1.bf16.msra.mxu0 0
  %1300 = vmatprep.subr.bf16.mxu0 0
  %1301 = vmatpush1.bf16.msra.mxu0 0
  %1302 = vmatprep.subr.bf16.mxu0 0
  %1303 = vmatpush1.bf16.msra.mxu0 0
  %1304 = vmatprep.subr.bf16.mxu0 0
  %1305 = vmatpush1.bf16.msra.mxu0 0
  %1306 = vmatprep.subr.bf16.mxu0 0
  %1307 = vmatpush1.bf16.msra.mxu0 0
  %1308 = vmatprep.mubr.bf16.mxu0 0
  %1309 = vmatmul.mubr.bf16.gmra.mrb[0].mxu0 %v1274
  %v1310 = vpop.f32.mrb[0].mxu0
  %v1311 = vadd.f32 0.0, %v1310
  %v1312 = vpop.f32.mrb[0].mxu0
  %v1313 = vpop.f32.mrb[0].mxu0
  %v1314 = vadd.f32 0.0, %v1313
  %v1315 = vpop.f32.mrb[0].mxu0
  %1316 = vdwg.mxu0
  %v1319 = vunpack.c.l.b16 %v1240
  %v1320 = vunpack.c.l.b16 %v1241
  %v1321 = vpack.c.b16 %v1320, %v1319
  %v1324 = vunpack.c.l.b16 %v1250
  %v1325 = vunpack.c.l.b16 %v1251
  %v1326 = vpack.c.b16 %v1325, %v1324
  %v1329 = vsel %vm59, %v1321, 0
  %1331 = vmatprep.subr.bf16.mxu0 0
  %1332 = vmatpush1.bf16.msra.mxu0 %v1326
  %1333 = vmatprep.subr.bf16.mxu0 0
  %1334 = vmatpush1.bf16.msra.mxu0 0
  %1335 = vmatprep.subr.bf16.mxu0 0
  %1336 = vmatpush1.bf16.msra.mxu0 0
  %1337 = vmatprep.subr.bf16.mxu0 0
  %1338 = vmatpush1.bf16.msra.mxu0 0
  %1339 = vmatprep.subr.bf16.mxu0 0
  %1340 = vmatpush1.bf16.msra.mxu0 0
  %1341 = vmatprep.subr.bf16.mxu0 0
  %1342 = vmatpush1.bf16.msra.mxu0 0
  %1343 = vmatprep.subr.bf16.mxu0 0
  %1344 = vmatpush1.bf16.msra.mxu0 0
  %1345 = vmatprep.subr.bf16.mxu0 0
  %1346 = vmatpush1.bf16.msra.mxu0 0
  %1347 = vmatprep.subr.bf16.mxu0 0
  %1348 = vmatpush1.bf16.msra.mxu0 0
  %1349 = vmatprep.subr.bf16.mxu0 0
  %1350 = vmatpush1.bf16.msra.mxu0 0
  %1351 = vmatprep.subr.bf16.mxu0 0
  %1352 = vmatpush1.bf16.msra.mxu0 0
  %1353 = vmatprep.subr.bf16.mxu0 0
  %1354 = vmatpush1.bf16.msra.mxu0 0
  %1355 = vmatprep.subr.bf16.mxu0 0
  %1356 = vmatpush1.bf16.msra.mxu0 0
  %1357 = vmatprep.subr.bf16.mxu0 0
  %1358 = vmatpush1.bf16.msra.mxu0 0
  %1359 = vmatprep.subr.bf16.mxu0 0
  %1360 = vmatpush1.bf16.msra.mxu0 0
  %1361 = vmatprep.subr.bf16.mxu0 0
  %1362 = vmatpush1.bf16.msra.mxu0 0
  %1363 = vmatprep.mubr.bf16.mxu0 0
  %1364 = vmatmul.mubr.bf16.gmra.mrb[0].mxu0 %v1329
  %v1365 = vpop.f32.mrb[0].mxu0
  %v1366 = vadd.f32 0.0, %v1365
  %v1367 = vpop.f32.mrb[0].mxu0
  %v1368 = vpop.f32.mrb[0].mxu0
  %v1369 = vadd.f32 0.0, %v1368
  %v1370 = vpop.f32.mrb[0].mxu0
  %1371 = vdwg.mxu0
  %v1372 = vpack.c.bf16 %v1314, %v1311
  %v1373 = vpack.c.bf16 %v1369, %v1366
  %v1376 = vunpack.c.l.b16 %v1253
  %v1377 = vunpack.c.l.b16 %v1254
  %v1378 = vpack.c.b16 %v1377, %v1376
  %v1381 = vunpack.c.l.b16 %v1243
  %v1382 = vunpack.c.l.b16 %v1244
  %v1383 = vpack.c.b16 %v1382, %v1381
  %v1386 = vsel %vm59, %v1378, 0
  %1388 = vmatprep.subr.bf16.mxu0 0
  %1389 = vmatpush1.bf16.msra.mxu0 %v1383
  %1390 = vmatprep.subr.bf16.mxu0 0
  %1391 = vmatpush1.bf16.msra.mxu0 0
  %1392 = vmatprep.subr.bf16.mxu0 0
  %1393 = vmatpush1.bf16.msra.mxu0 0
  %1394 = vmatprep.subr.bf16.mxu0 0
  %1395 = vmatpush1.bf16.msra.mxu0 0
  %1396 = vmatprep.subr.bf16.mxu0 0
  %1397 = vmatpush1.bf16.msra.mxu0 0
  %1398 = vmatprep.subr.bf16.mxu0 0
  %1399 = vmatpush1.bf16.msra.mxu0 0
  %1400 = vmatprep.subr.bf16.mxu0 0
  %1401 = vmatpush1.bf16.msra.mxu0 0
  %1402 = vmatprep.subr.bf16.mxu0 0
  %1403 = vmatpush1.bf16.msra.mxu0 0
  %1404 = vmatprep.subr.bf16.mxu0 0
  %1405 = vmatpush1.bf16.msra.mxu0 0
  %1406 = vmatprep.subr.bf16.mxu0 0
  %1407 = vmatpush1.bf16.msra.mxu0 0
  %1408 = vmatprep.subr.bf16.mxu0 0
  %1409 = vmatpush1.bf16.msra.mxu0 0
  %1410 = vmatprep.subr.bf16.mxu0 0
  %1411 = vmatpush1.bf16.msra.mxu0 0
  %1412 = vmatprep.subr.bf16.mxu0 0
  %1413 = vmatpush1.bf16.msra.mxu0 0
  %1414 = vmatprep.subr.bf16.mxu0 0
  %1415 = vmatpush1.bf16.msra.mxu0 0
  %1416 = vmatprep.subr.bf16.mxu0 0
  %1417 = vmatpush1.bf16.msra.mxu0 0
  %1418 = vmatprep.subr.bf16.mxu0 0
  %1419 = vmatpush1.bf16.msra.mxu0 0
  %1420 = vmatprep.mubr.bf16.mxu0 0
  %1421 = vmatmul.mubr.bf16.gmra.mrb[0].mxu0 %v1386
  %v1422 = vpop.f32.mrb[0].mxu0
  %v1423 = vadd.f32 0.0, %v1422
  %v1424 = vpop.f32.mrb[0].mxu0
  %v1425 = vpop.f32.mrb[0].mxu0
  %v1426 = vadd.f32 0.0, %v1425
  %v1427 = vpop.f32.mrb[0].mxu0
  %1428 = vdwg.mxu0
  %v1431 = vunpack.c.l.b16 %v1255
  %v1432 = vunpack.c.l.b16 %v1256
  %v1433 = vpack.c.b16 %v1432, %v1431
  %v1436 = vunpack.c.l.b16 %v1245
  %v1437 = vunpack.c.l.b16 %v1246
  %v1438 = vpack.c.b16 %v1437, %v1436
  %v1441 = vsel %vm59, %v1433, 0
  %1443 = vmatprep.subr.bf16.mxu0 0
  %1444 = vmatpush1.bf16.msra.mxu0 %v1438
  %1445 = vmatprep.subr.bf16.mxu0 0
  %1446 = vmatpush1.bf16.msra.mxu0 0
  %1447 = vmatprep.subr.bf16.mxu0 0
  %1448 = vmatpush1.bf16.msra.mxu0 0
  %1449 = vmatprep.subr.bf16.mxu0 0
  %1450 = vmatpush1.bf16.msra.mxu0 0
  %1451 = vmatprep.subr.bf16.mxu0 0
  %1452 = vmatpush1.bf16.msra.mxu0 0
  %1453 = vmatprep.subr.bf16.mxu0 0
  %1454 = vmatpush1.bf16.msra.mxu0 0
  %1455 = vmatprep.subr.bf16.mxu0 0
  %1456 = vmatpush1.bf16.msra.mxu0 0
  %1457 = vmatprep.subr.bf16.mxu0 0
  %1458 = vmatpush1.bf16.msra.mxu0 0
  %1459 = vmatprep.subr.bf16.mxu0 0
  %1460 = vmatpush1.bf16.msra.mxu0 0
  %1461 = vmatprep.subr.bf16.mxu0 0
  %1462 = vmatpush1.bf16.msra.mxu0 0
  %1463 = vmatprep.subr.bf16.mxu0 0
  %1464 = vmatpush1.bf16.msra.mxu0 0
  %1465 = vmatprep.subr.bf16.mxu0 0
  %1466 = vmatpush1.bf16.msra.mxu0 0
  %1467 = vmatprep.subr.bf16.mxu0 0
  %1468 = vmatpush1.bf16.msra.mxu0 0
  %1469 = vmatprep.subr.bf16.mxu0 0
  %1470 = vmatpush1.bf16.msra.mxu0 0
  %1471 = vmatprep.subr.bf16.mxu0 0
  %1472 = vmatpush1.bf16.msra.mxu0 0
  %1473 = vmatprep.subr.bf16.mxu0 0
  %1474 = vmatpush1.bf16.msra.mxu0 0
  %1475 = vmatprep.mubr.bf16.mxu0 0
  %1476 = vmatmul.mubr.bf16.gmra.mrb[0].mxu0 %v1441
  %v1477 = vpop.f32.mrb[0].mxu0
  %v1478 = vadd.f32 0.0, %v1477
  %v1479 = vpop.f32.mrb[0].mxu0
  %v1480 = vpop.f32.mrb[0].mxu0
  %v1481 = vadd.f32 0.0, %v1480
  %v1482 = vpop.f32.mrb[0].mxu0
  %1483 = vdwg.mxu0
  %v1484 = vpack.c.bf16 %v1426, %v1423
  %v1485 = vpack.c.bf16 %v1481, %v1478
  %v1488 = vunpack.c.l.b16 %v1258
  %v1489 = vunpack.c.l.b16 %v1259
  %v1490 = vpack.c.b16 %v1489, %v1488
  %v1493 = vsel %vm59, %v1372, 0
  %1495 = vmatprep.subr.bf16.mxu0 0
  %1496 = vmatpush1.bf16.msra.mxu0 %v1490
  %1497 = vmatprep.subr.bf16.mxu0 0
  %1498 = vmatpush1.bf16.msra.mxu0 0
  %1499 = vmatprep.subr.bf16.mxu0 0
  %1500 = vmatpush1.bf16.msra.mxu0 0
  %1501 = vmatprep.subr.bf16.mxu0 0
  %1502 = vmatpush1.bf16.msra.mxu0 0
  %1503 = vmatprep.subr.bf16.mxu0 0
  %1504 = vmatpush1.bf16.msra.mxu0 0
  %1505 = vmatprep.subr.bf16.mxu0 0
  %1506 = vmatpush1.bf16.msra.mxu0 0
  %1507 = vmatprep.subr.bf16.mxu0 0
  %1508 = vmatpush1.bf16.msra.mxu0 0
  %1509 = vmatprep.subr.bf16.mxu0 0
  %1510 = vmatpush1.bf16.msra.mxu0 0
  %1511 = vmatprep.subr.bf16.mxu0 0
  %1512 = vmatpush1.bf16.msra.mxu0 0
  %1513 = vmatprep.subr.bf16.mxu0 0
  %1514 = vmatpush1.bf16.msra.mxu0 0
  %1515 = vmatprep.subr.bf16.mxu0 0
  %1516 = vmatpush1.bf16.msra.mxu0 0
  %1517 = vmatprep.subr.bf16.mxu0 0
  %1518 = vmatpush1.bf16.msra.mxu0 0
  %1519 = vmatprep.subr.bf16.mxu0 0
  %1520 = vmatpush1.bf16.msra.mxu0 0
  %1521 = vmatprep.subr.bf16.mxu0 0
  %1522 = vmatpush1.bf16.msra.mxu0 0
  %1523 = vmatprep.subr.bf16.mxu0 0
  %1524 = vmatpush1.bf16.msra.mxu0 0
  %1525 = vmatprep.subr.bf16.mxu0 0
  %1526 = vmatpush1.bf16.msra.mxu0 0
  %1527 = vmatprep.mubr.bf16.mxu0 0
  %1528 = vmatmul.mubr.bf16.gmra.mrb[0].mxu0 %v1493
  %v1529 = vpop.f32.mrb[0].mxu0
  %v1530 = vadd.f32 0.0, %v1529
  %v1531 = vpop.f32.mrb[0].mxu0
  %v1532 = vpop.f32.mrb[0].mxu0
  %v1533 = vadd.f32 0.0, %v1532
  %v1534 = vpop.f32.mrb[0].mxu0
  %1535 = vdwg.mxu0
  %v1538 = vunpack.c.l.b16 %v1260
  %v1539 = vunpack.c.l.b16 %v1261
  %v1540 = vpack.c.b16 %v1539, %v1538
  %v1543 = vsel %vm59, %v1373, 0
  %1545 = vmatprep.subr.bf16.mxu0 0
  %1546 = vmatpush1.bf16.msra.mxu0 %v1540
  %1547 = vmatprep.subr.bf16.mxu0 0
  %1548 = vmatpush1.bf16.msra.mxu0 0
  %1549 = vmatprep.subr.bf16.mxu0 0
  %1550 = vmatpush1.bf16.msra.mxu0 0
  %1551 = vmatprep.subr.bf16.mxu0 0
  %1552 = vmatpush1.bf16.msra.mxu0 0
  %1553 = vmatprep.subr.bf16.mxu0 0
  %1554 = vmatpush1.bf16.msra.mxu0 0
  %1555 = vmatprep.subr.bf16.mxu0 0
  %1556 = vmatpush1.bf16.msra.mxu0 0
  %1557 = vmatprep.subr.bf16.mxu0 0
  %1558 = vmatpush1.bf16.msra.mxu0 0
  %1559 = vmatprep.subr.bf16.mxu0 0
  %1560 = vmatpush1.bf16.msra.mxu0 0
  %1561 = vmatprep.subr.bf16.mxu0 0
  %1562 = vmatpush1.bf16.msra.mxu0 0
  %1563 = vmatprep.subr.bf16.mxu0 0
  %1564 = vmatpush1.bf16.msra.mxu0 0
  %1565 = vmatprep.subr.bf16.mxu0 0
  %1566 = vmatpush1.bf16.msra.mxu0 0
  %1567 = vmatprep.subr.bf16.mxu0 0
  %1568 = vmatpush1.bf16.msra.mxu0 0
  %1569 = vmatprep.subr.bf16.mxu0 0
  %1570 = vmatpush1.bf16.msra.mxu0 0
  %1571 = vmatprep.subr.bf16.mxu0 0
  %1572 = vmatpush1.bf16.msra.mxu0 0
  %1573 = vmatprep.subr.bf16.mxu0 0
  %1574 = vmatpush1.bf16.msra.mxu0 0
  %1575 = vmatprep.subr.bf16.mxu0 0
  %1576 = vmatpush1.bf16.msra.mxu0 0
  %1577 = vmatprep.mubr.bf16.mxu0 0
  %1578 = vmatmul.mubr.bf16.gmra.mrb[0].mxu0 %v1543
  %v1579 = vpop.f32.mrb[0].mxu0
  %v1580 = vadd.f32 0.0, %v1579
  %v1581 = vpop.f32.mrb[0].mxu0
  %v1582 = vpop.f32.mrb[0].mxu0
  %v1583 = vadd.f32 0.0, %v1582
  %v1584 = vpop.f32.mrb[0].mxu0
  %1585 = vdwg.mxu0
  %v1586 = vpack.c.bf16 %v1533, %v1530
  %v1587 = vpack.c.bf16 %v1583, %v1580
  %v1589 = vsel %vm59, %v1586, 0
  %1591 = vmatprep.subr.bf16.mxu0 0
  %1592 = vmatpush1.bf16.msra.mxu0 %v1484
  %1593 = vmatprep.subr.bf16.mxu0 0
  %1594 = vmatpush1.bf16.msra.mxu0 0
  %1595 = vmatprep.subr.bf16.mxu0 0
  %1596 = vmatpush1.bf16.msra.mxu0 0
  %1597 = vmatprep.subr.bf16.mxu0 0
  %1598 = vmatpush1.bf16.msra.mxu0 0
  %1599 = vmatprep.subr.bf16.mxu0 0
  %1600 = vmatpush1.bf16.msra.mxu0 0
  %1601 = vmatprep.subr.bf16.mxu0 0
  %1602 = vmatpush1.bf16.msra.mxu0 0
  %1603 = vmatprep.subr.bf16.mxu0 0
  %1604 = vmatpush1.bf16.msra.mxu0 0
  %1605 = vmatprep.subr.bf16.mxu0 0
  %1606 = vmatpush1.bf16.msra.mxu0 0
  %1607 = vmatprep.subr.bf16.mxu0 0
  %1608 = vmatpush1.bf16.msra.mxu0 0
  %1609 = vmatprep.subr.bf16.mxu0 0
  %1610 = vmatpush1.bf16.msra.mxu0 0
  %1611 = vmatprep.subr.bf16.mxu0 0
  %1612 = vmatpush1.bf16.msra.mxu0 0
  %1613 = vmatprep.subr.bf16.mxu0 0
  %1614 = vmatpush1.bf16.msra.mxu0 0
  %1615 = vmatprep.subr.bf16.mxu0 0
  %1616 = vmatpush1.bf16.msra.mxu0 0
  %1617 = vmatprep.subr.bf16.mxu0 0
  %1618 = vmatpush1.bf16.msra.mxu0 0
  %1619 = vmatprep.subr.bf16.mxu0 0
  %1620 = vmatpush1.bf16.msra.mxu0 0
  %1621 = vmatprep.subr.bf16.mxu0 0
  %1622 = vmatpush1.bf16.msra.mxu0 0
  %1623 = vmatprep.mubr.bf16.mxu0 0
  %1624 = vmatmul.mubr.bf16.gmra.mrb[0].mxu0 %v1589
  %v1625 = vpop.f32.mrb[0].mxu0
  %v1626 = vadd.f32 0.0, %v1625
  %v1627 = vpop.f32.mrb[0].mxu0
  %v1628 = vpop.f32.mrb[0].mxu0
  %v1629 = vadd.f32 0.0, %v1628
  %v1630 = vpop.f32.mrb[0].mxu0
  %1631 = vdwg.mxu0
  %v1633 = vsel %vm59, %v1587, 0
  %1635 = vmatprep.subr.bf16.mxu0 0
  %1636 = vmatpush1.bf16.msra.mxu0 %v1485
  %1637 = vmatprep.subr.bf16.mxu0 0
  %1638 = vmatpush1.bf16.msra.mxu0 0
  %1639 = vmatprep.subr.bf16.mxu0 0
  %1640 = vmatpush1.bf16.msra.mxu0 0
  %1641 = vmatprep.subr.bf16.mxu0 0
  %1642 = vmatpush1.bf16.msra.mxu0 0
  %1643 = vmatprep.subr.bf16.mxu0 0
  %1644 = vmatpush1.bf16.msra.mxu0 0
  %1645 = vmatprep.subr.bf16.mxu0 0
  %1646 = vmatpush1.bf16.msra.mxu0 0
  %1647 = vmatprep.subr.bf16.mxu0 0
  %1648 = vmatpush1.bf16.msra.mxu0 0
  %1649 = vmatprep.subr.bf16.mxu0 0
  %1650 = vmatpush1.bf16.msra.mxu0 0
  %1651 = vmatprep.subr.bf16.mxu0 0
  %1652 = vmatpush1.bf16.msra.mxu0 0
  %1653 = vmatprep.subr.bf16.mxu0 0
  %1654 = vmatpush1.bf16.msra.mxu0 0
  %1655 = vmatprep.subr.bf16.mxu0 0
  %1656 = vmatpush1.bf16.msra.mxu0 0
  %1657 = vmatprep.subr.bf16.mxu0 0
  %1658 = vmatpush1.bf16.msra.mxu0 0
  %1659 = vmatprep.subr.bf16.mxu0 0
  %1660 = vmatpush1.bf16.msra.mxu0 0
  %1661 = vmatprep.subr.bf16.mxu0 0
  %1662 = vmatpush1.bf16.msra.mxu0 0
  %1663 = vmatprep.subr.bf16.mxu0 0
  %1664 = vmatpush1.bf16.msra.mxu0 0
  %1665 = vmatprep.subr.bf16.mxu0 0
  %1666 = vmatpush1.bf16.msra.mxu0 0
  %1667 = vmatprep.mubr.bf16.mxu0 0
  %1668 = vmatmul.mubr.bf16.gmra.mrb[0].mxu0 %v1633
  %v1669 = vpop.f32.mrb[0].mxu0
  %v1670 = vadd.f32 0.0, %v1669
  %v1671 = vpop.f32.mrb[0].mxu0
  %v1672 = vpop.f32.mrb[0].mxu0
  %v1673 = vadd.f32 0.0, %v1672
  %v1674 = vpop.f32.mrb[0].mxu0
  %1675 = vdwg.mxu0
  %vm1676 = vcmp.gt.f32.partialorder %v1626, 0.0
  %vm1677 = vcmp.gt.f32.partialorder %v1629, 0.0
  %vm1678 = vcmp.gt.f32.partialorder %v1670, 0.0
  %vm1679 = vcmp.gt.f32.partialorder %v1673, 0.0
  %v1680 = vmul.f32 %v1626, 0.2
  %v1681 = vmul.f32 %v1629, 0.2
  %v1682 = vmul.f32 %v1670, 0.2
  %v1683 = vmul.f32 %v1673, 0.2
  %v1684 = vsel %vm1676, %v1626, %v1680
  %v1685 = vsel %vm1677, %v1629, %v1681
  %v1686 = vsel %vm1678, %v1670, %v1682
  %v1687 = vsel %vm1679, %v1673, %v1683
  %v1688 = vadd.f32 %v1684, %v26
  %v1689 = vadd.f32 %v1685, %v27
  %v1690 = vadd.f32 %v1686, %v26
  %v1691 = vadd.f32 %v1687, %v27
  %v1692 = vsel %vm59, %v1688, -inf
  %1693 = vmax.xlane.f32.xlu0 %v1692
  %v1694 = vpop.xlane.xlu0 %1693
  %v1695 = vsel %vm59, %v1689, -inf
  %1696 = vmax.xlane.f32.xlu0 %v1695
  %v1697 = vpop.xlane.xlu0 %1696
  %v1698 = vsel %vm59, %v1690, -inf
  %1699 = vmax.xlane.f32.xlu0 %v1698
  %v1700 = vpop.xlane.xlu0 %1699
  %v1701 = vsel %vm59, %v1691, -inf
  %1702 = vmax.xlane.f32.xlu0 %v1701
  %v1703 = vpop.xlane.xlu0 %1702
  %v1704 = vsub.f32 %v1688, %v1694
  %v1705 = vsub.f32 %v1689, %v1697
  %v1706 = vsub.f32 %v1690, %v1700
  %v1707 = vsub.f32 %v1691, %v1703
  %v1708 = vmul.f32 %v1704, 1.442695
  %v1709 = vpow.pop %v1708
  %v1710 = vmul.f32 %v1705, 1.442695
  %v1711 = vpow.pop %v1710
  %v1712 = vmul.f32 %v1706, 1.442695
  %v1713 = vpow.pop %v1712
  %v1714 = vmul.f32 %v1707, 1.442695
  %v1715 = vpow.pop %v1714
  %v1716 = vsel %vm59, %v1709, 0.0
  %1717 = vadd.xlane.f32.xlu0 %v1716
  %v1718 = vpop.xlane.xlu0 %1717
  %v1719 = vsel %vm59, %v1711, 0.0
  %1720 = vadd.xlane.f32.xlu0 %v1719
  %v1721 = vpop.xlane.xlu0 %1720
  %v1722 = vsel %vm59, %v1713, 0.0
  %1723 = vadd.xlane.f32.xlu0 %v1722
  %v1724 = vpop.xlane.xlu0 %1723
  %v1725 = vsel %vm59, %v1715, 0.0
  %1726 = vadd.xlane.f32.xlu0 %v1725
  %v1727 = vpop.xlane.xlu0 %1726
  %v1728 = vrcp.pop %v1718
  %v1729 = vrcp.pop %v1721
  %v1730 = vrcp.pop %v1724
  %v1731 = vrcp.pop %v1727
  %v1732 = vmul.f32 %v1709, %v1728
  %v1733 = vmul.f32 %v1711, %v1729
  %v1734 = vmul.f32 %v1713, %v1730
  %v1735 = vmul.f32 %v1715, %v1731
  %v1736 = vpack.c.bf16 %v1733, %v1732
  %v1737 = vpack.c.bf16 %v1735, %v1734
  %v1739 = vsel %vm59, %v1736, 0
  %1741 = vmatprep.subr.bf16.mxu0 0
  %1742 = vmatpush1.bf16.msra.mxu0 %v1372
  %1743 = vmatprep.subr.bf16.mxu0 0
  %1744 = vmatpush1.bf16.msra.mxu0 0
  %1745 = vmatprep.subr.bf16.mxu0 0
  %1746 = vmatpush1.bf16.msra.mxu0 0
  %1747 = vmatprep.subr.bf16.mxu0 0
  %1748 = vmatpush1.bf16.msra.mxu0 0
  %1749 = vmatprep.subr.bf16.mxu0 0
  %1750 = vmatpush1.bf16.msra.mxu0 0
  %1751 = vmatprep.subr.bf16.mxu0 0
  %1752 = vmatpush1.bf16.msra.mxu0 0
  %1753 = vmatprep.subr.bf16.mxu0 0
  %1754 = vmatpush1.bf16.msra.mxu0 0
  %1755 = vmatprep.subr.bf16.mxu0 0
  %1756 = vmatpush1.bf16.msra.mxu0 0
  %1757 = vmatprep.subr.bf16.mxu0 0
  %1758 = vmatpush1.bf16.msra.mxu0 0
  %1759 = vmatprep.subr.bf16.mxu0 0
  %1760 = vmatpush1.bf16.msra.mxu0 0
  %1761 = vmatprep.subr.bf16.mxu0 0
  %1762 = vmatpush1.bf16.msra.mxu0 0
  %1763 = vmatprep.subr.bf16.mxu0 0
  %1764 = vmatpush1.bf16.msra.mxu0 0
  %1765 = vmatprep.subr.bf16.mxu0 0
  %1766 = vmatpush1.bf16.msra.mxu0 0
  %1767 = vmatprep.subr.bf16.mxu0 0
  %1768 = vmatpush1.bf16.msra.mxu0 0
  %1769 = vmatprep.subr.bf16.mxu0 0
  %1770 = vmatpush1.bf16.msra.mxu0 0
  %1771 = vmatprep.subr.bf16.mxu0 0
  %1772 = vmatpush1.bf16.msra.mxu0 0
  %1773 = vmatprep.mubr.bf16.mxu0 0
  %1774 = vmatmul.mubr.bf16.gmra.mrb[0].mxu0 %v1739
  %v1775 = vpop.f32.mrb[0].mxu0
  %v1776 = vadd.f32 0.0, %v1775
  %v1777 = vpop.f32.mrb[0].mxu0
  %v1778 = vpop.f32.mrb[0].mxu0
  %v1779 = vadd.f32 0.0, %v1778
  %v1780 = vpop.f32.mrb[0].mxu0
  %1781 = vdwg.mxu0
  %v1783 = vsel %vm59, %v1737, 0
  %1785 = vmatprep.subr.bf16.mxu0 0
  %1786 = vmatpush1.bf16.msra.mxu0 %v1373
  %1787 = vmatprep.subr.bf16.mxu0 0
  %1788 = vmatpush1.bf16.msra.mxu0 0
  %1789 = vmatprep.subr.bf16.mxu0 0
  %1790 = vmatpush1.bf16.msra.mxu0 0
  %1791 = vmatprep.subr.bf16.mxu0 0
  %1792 = vmatpush1.bf16.msra.mxu0 0
  %1793 = vmatprep.subr.bf16.mxu0 0
  %1794 = vmatpush1.bf16.msra.mxu0 0
  %1795 = vmatprep.subr.bf16.mxu0 0
  %1796 = vmatpush1.bf16.msra.mxu0 0
  %1797 = vmatprep.subr.bf16.mxu0 0
  %1798 = vmatpush1.bf16.msra.mxu0 0
  %1799 = vmatprep.subr.bf16.mxu0 0
  %1800 = vmatpush1.bf16.msra.mxu0 0
  %1801 = vmatprep.subr.bf16.mxu0 0
  %1802 = vmatpush1.bf16.msra.mxu0 0
  %1803 = vmatprep.subr.bf16.mxu0 0
  %1804 = vmatpush1.bf16.msra.mxu0 0
  %1805 = vmatprep.subr.bf16.mxu0 0
  %1806 = vmatpush1.bf16.msra.mxu0 0
  %1807 = vmatprep.subr.bf16.mxu0 0
  %1808 = vmatpush1.bf16.msra.mxu0 0
  %1809 = vmatprep.subr.bf16.mxu0 0
  %1810 = vmatpush1.bf16.msra.mxu0 0
  %1811 = vmatprep.subr.bf16.mxu0 0
  %1812 = vmatpush1.bf16.msra.mxu0 0
  %1813 = vmatprep.subr.bf16.mxu0 0
  %1814 = vmatpush1.bf16.msra.mxu0 0
  %1815 = vmatprep.subr.bf16.mxu0 0
  %1816 = vmatpush1.bf16.msra.mxu0 0
  %1817 = vmatprep.mubr.bf16.mxu0 0
  %1818 = vmatmul.mubr.bf16.gmra.mrb[0].mxu0 %v1783
  %v1819 = vpop.f32.mrb[0].mxu0
  %v1820 = vadd.f32 0.0, %v1819
  %v1821 = vpop.f32.mrb[0].mxu0
  %v1822 = vpop.f32.mrb[0].mxu0
  %v1823 = vadd.f32 0.0, %v1822
  %v1824 = vpop.f32.mrb[0].mxu0
  %1825 = vdwg.mxu0
  %1828 = vrot.lane.b32.xlu0 %v1776, 64
  %v1829 = vpop.permute.xlu0 %1828
  %1830 = vrot.lane.b32.xlu0 %v1779, 64
  %v1831 = vpop.permute.xlu0 %1830
  %vm1834 = vcmask 654848
  %1835 = vst.msk [vmem:[%s6] sm:$0xff] %vm1834, %v1829
  %1836 = vst.msk [vmem:[%s6 + $0x8] sm:$0xff] %vm1834, %v1831
  %1839 = vrot.lane.b32.xlu0 %v1820, 80
  %v1840 = vpop.permute.xlu0 %1839
  %1841 = vrot.lane.b32.xlu0 %v1823, 80
  %v1842 = vpop.permute.xlu0 %1841
  %vm1845 = vcmask 786048
  %1846 = vst.msk [vmem:[%s6] sm:$0xff] %vm1845, %v1840
  %1847 = vst.msk [vmem:[%s6 + $0x8] sm:$0xff] %vm1845, %v1842
  %s1848 = scalar_lea.vmem %s0, 48
  %v1849 = vld [vmem:[%s1848] sm:$0xf]
  %v1850 = vld [vmem:[%s1848 + $0x4] sm:$0xf]
  %v1851 = vld [vmem:[%s1848 + $0x8] sm:$0xf]
  %v1852 = vld [vmem:[%s1848 + $0xc] sm:$0xf]
  %s1853 = scalar_lea.vmem %s1, 48
  %v1854 = vld [vmem:[%s1853] sm:$0xf]
  %v1855 = vld [vmem:[%s1853 + $0x4] sm:$0xf]
  %v1856 = vld [vmem:[%s1853 + $0x8] sm:$0xf]
  %v1857 = vld [vmem:[%s1853 + $0xc] sm:$0xf]
  %s1858 = scalar_lea.vmem %s2, 48
  %v1859 = vld [vmem:[%s1858] sm:$0xf]
  %v1860 = vld [vmem:[%s1858 + $0x4] sm:$0xf]
  %v1861 = vld [vmem:[%s1858 + $0x8] sm:$0xf]
  %v1862 = vld [vmem:[%s1858 + $0xc] sm:$0xf]
  %s1863 = scalar_lea.vmem %s3, 48
  %v1864 = vld [vmem:[%s1863] sm:$0xf]
  %v1865 = vld [vmem:[%s1863 + $0x4] sm:$0xf]
  %v1866 = vld [vmem:[%s1863 + $0x8] sm:$0xf]
  %v1867 = vld [vmem:[%s1863 + $0xc] sm:$0xf]
  %s1868 = scalar_lea.vmem %s4, 48
  %v1869 = vld [vmem:[%s1868] sm:$0xf]
  %v1870 = vld [vmem:[%s1868 + $0x4] sm:$0xf]
  %v1871 = vld [vmem:[%s1868 + $0x8] sm:$0xf]
  %v1872 = vld [vmem:[%s1868 + $0xc] sm:$0xf]
  %v1875 = vunpack.c.l.b16 %v1849
  %v1876 = vunpack.c.l.b16 %v1850
  %v1877 = vpack.c.b16 %v1876, %v1875
  %v1880 = vunpack.c.l.b16 %v1859
  %v1881 = vunpack.c.l.b16 %v1860
  %v1882 = vpack.c.b16 %v1881, %v1880
  %v1885 = vsel %vm59, %v1877, 0
  %1887 = vmatprep.subr.bf16.mxu0 0
  %1888 = vmatpush1.bf16.msra.mxu0 %v1882
  %1889 = vmatprep.subr.bf16.mxu0 0
  %1890 = vmatpush1.bf16.msra.mxu0 0
  %1891 = vmatprep.subr.bf16.mxu0 0
  %1892 = vmatpush1.bf16.msra.mxu0 0
  %1893 = vmatprep.subr.bf16.mxu0 0
  %1894 = vmatpush1.bf16.msra.mxu0 0
  %1895 = vmatprep.subr.bf16.mxu0 0
  %1896 = vmatpush1.bf16.msra.mxu0 0
  %1897 = vmatprep.subr.bf16.mxu0 0
  %1898 = vmatpush1.bf16.msra.mxu0 0
  %1899 = vmatprep.subr.bf16.mxu0 0
  %1900 = vmatpush1.bf16.msra.mxu0 0
  %1901 = vmatprep.subr.bf16.mxu0 0
  %1902 = vmatpush1.bf16.msra.mxu0 0
  %1903 = vmatprep.subr.bf16.mxu0 0
  %1904 = vmatpush1.bf16.msra.mxu0 0
  %1905 = vmatprep.subr.bf16.mxu0 0
  %1906 = vmatpush1.bf16.msra.mxu0 0
  %1907 = vmatprep.subr.bf16.mxu0 0
  %1908 = vmatpush1.bf16.msra.mxu0 0
  %1909 = vmatprep.subr.bf16.mxu0 0
  %1910 = vmatpush1.bf16.msra.mxu0 0
  %1911 = vmatprep.subr.bf16.mxu0 0
  %1912 = vmatpush1.bf16.msra.mxu0 0
  %1913 = vmatprep.subr.bf16.mxu0 0
  %1914 = vmatpush1.bf16.msra.mxu0 0
  %1915 = vmatprep.subr.bf16.mxu0 0
  %1916 = vmatpush1.bf16.msra.mxu0 0
  %1917 = vmatprep.subr.bf16.mxu0 0
  %1918 = vmatpush1.bf16.msra.mxu0 0
  %1919 = vmatprep.mubr.bf16.mxu0 0
  %1920 = vmatmul.mubr.bf16.gmra.mrb[0].mxu0 %v1885
  %v1921 = vpop.f32.mrb[0].mxu0
  %v1922 = vadd.f32 0.0, %v1921
  %v1923 = vpop.f32.mrb[0].mxu0
  %v1924 = vpop.f32.mrb[0].mxu0
  %v1925 = vadd.f32 0.0, %v1924
  %v1926 = vpop.f32.mrb[0].mxu0
  %1927 = vdwg.mxu0
  %v1930 = vunpack.c.l.b16 %v1851
  %v1931 = vunpack.c.l.b16 %v1852
  %v1932 = vpack.c.b16 %v1931, %v1930
  %v1935 = vunpack.c.l.b16 %v1861
  %v1936 = vunpack.c.l.b16 %v1862
  %v1937 = vpack.c.b16 %v1936, %v1935
  %v1940 = vsel %vm59, %v1932, 0
  %1942 = vmatprep.subr.bf16.mxu0 0
  %1943 = vmatpush1.bf16.msra.mxu0 %v1937
  %1944 = vmatprep.subr.bf16.mxu0 0
  %1945 = vmatpush1.bf16.msra.mxu0 0
  %1946 = vmatprep.subr.bf16.mxu0 0
  %1947 = vmatpush1.bf16.msra.mxu0 0
  %1948 = vmatprep.subr.bf16.mxu0 0
  %1949 = vmatpush1.bf16.msra.mxu0 0
  %1950 = vmatprep.subr.bf16.mxu0 0
  %1951 = vmatpush1.bf16.msra.mxu0 0
  %1952 = vmatprep.subr.bf16.mxu0 0
  %1953 = vmatpush1.bf16.msra.mxu0 0
  %1954 = vmatprep.subr.bf16.mxu0 0
  %1955 = vmatpush1.bf16.msra.mxu0 0
  %1956 = vmatprep.subr.bf16.mxu0 0
  %1957 = vmatpush1.bf16.msra.mxu0 0
  %1958 = vmatprep.subr.bf16.mxu0 0
  %1959 = vmatpush1.bf16.msra.mxu0 0
  %1960 = vmatprep.subr.bf16.mxu0 0
  %1961 = vmatpush1.bf16.msra.mxu0 0
  %1962 = vmatprep.subr.bf16.mxu0 0
  %1963 = vmatpush1.bf16.msra.mxu0 0
  %1964 = vmatprep.subr.bf16.mxu0 0
  %1965 = vmatpush1.bf16.msra.mxu0 0
  %1966 = vmatprep.subr.bf16.mxu0 0
  %1967 = vmatpush1.bf16.msra.mxu0 0
  %1968 = vmatprep.subr.bf16.mxu0 0
  %1969 = vmatpush1.bf16.msra.mxu0 0
  %1970 = vmatprep.subr.bf16.mxu0 0
  %1971 = vmatpush1.bf16.msra.mxu0 0
  %1972 = vmatprep.subr.bf16.mxu0 0
  %1973 = vmatpush1.bf16.msra.mxu0 0
  %1974 = vmatprep.mubr.bf16.mxu0 0
  %1975 = vmatmul.mubr.bf16.gmra.mrb[0].mxu0 %v1940
  %v1976 = vpop.f32.mrb[0].mxu0
  %v1977 = vadd.f32 0.0, %v1976
  %v1978 = vpop.f32.mrb[0].mxu0
  %v1979 = vpop.f32.mrb[0].mxu0
  %v1980 = vadd.f32 0.0, %v1979
  %v1981 = vpop.f32.mrb[0].mxu0
  %1982 = vdwg.mxu0
  %v1983 = vpack.c.bf16 %v1925, %v1922
  %v1984 = vpack.c.bf16 %v1980, %v1977
  %v1987 = vunpack.c.l.b16 %v1864
  %v1988 = vunpack.c.l.b16 %v1865
  %v1989 = vpack.c.b16 %v1988, %v1987
  %v1992 = vunpack.c.l.b16 %v1854
  %v1993 = vunpack.c.l.b16 %v1855
  %v1994 = vpack.c.b16 %v1993, %v1992
  %v1997 = vsel %vm59, %v1989, 0
  %1999 = vmatprep.subr.bf16.mxu0 0
  %2000 = vmatpush1.bf16.msra.mxu0 %v1994
  %2001 = vmatprep.subr.bf16.mxu0 0
  %2002 = vmatpush1.bf16.msra.mxu0 0
  %2003 = vmatprep.subr.bf16.mxu0 0
  %2004 = vmatpush1.bf16.msra.mxu0 0
  %2005 = vmatprep.subr.bf16.mxu0 0
  %2006 = vmatpush1.bf16.msra.mxu0 0
  %2007 = vmatprep.subr.bf16.mxu0 0
  %2008 = vmatpush1.bf16.msra.mxu0 0
  %2009 = vmatprep.subr.bf16.mxu0 0
  %2010 = vmatpush1.bf16.msra.mxu0 0
  %2011 = vmatprep.subr.bf16.mxu0 0
  %2012 = vmatpush1.bf16.msra.mxu0 0
  %2013 = vmatprep.subr.bf16.mxu0 0
  %2014 = vmatpush1.bf16.msra.mxu0 0
  %2015 = vmatprep.subr.bf16.mxu0 0
  %2016 = vmatpush1.bf16.msra.mxu0 0
  %2017 = vmatprep.subr.bf16.mxu0 0
  %2018 = vmatpush1.bf16.msra.mxu0 0
  %2019 = vmatprep.subr.bf16.mxu0 0
  %2020 = vmatpush1.bf16.msra.mxu0 0
  %2021 = vmatprep.subr.bf16.mxu0 0
  %2022 = vmatpush1.bf16.msra.mxu0 0
  %2023 = vmatprep.subr.bf16.mxu0 0
  %2024 = vmatpush1.bf16.msra.mxu0 0
  %2025 = vmatprep.subr.bf16.mxu0 0
  %2026 = vmatpush1.bf16.msra.mxu0 0
  %2027 = vmatprep.subr.bf16.mxu0 0
  %2028 = vmatpush1.bf16.msra.mxu0 0
  %2029 = vmatprep.subr.bf16.mxu0 0
  %2030 = vmatpush1.bf16.msra.mxu0 0
  %2031 = vmatprep.mubr.bf16.mxu0 0
  %2032 = vmatmul.mubr.bf16.gmra.mrb[0].mxu0 %v1997
  %v2033 = vpop.f32.mrb[0].mxu0
  %v2034 = vadd.f32 0.0, %v2033
  %v2035 = vpop.f32.mrb[0].mxu0
  %v2036 = vpop.f32.mrb[0].mxu0
  %v2037 = vadd.f32 0.0, %v2036
  %v2038 = vpop.f32.mrb[0].mxu0
  %2039 = vdwg.mxu0
  %v2042 = vunpack.c.l.b16 %v1866
  %v2043 = vunpack.c.l.b16 %v1867
  %v2044 = vpack.c.b16 %v2043, %v2042
  %v2047 = vunpack.c.l.b16 %v1856
  %v2048 = vunpack.c.l.b16 %v1857
  %v2049 = vpack.c.b16 %v2048, %v2047
  %v2052 = vsel %vm59, %v2044, 0
  %2054 = vmatprep.subr.bf16.mxu0 0
  %2055 = vmatpush1.bf16.msra.mxu0 %v2049
  %2056 = vmatprep.subr.bf16.mxu0 0
  %2057 = vmatpush1.bf16.msra.mxu0 0
  %2058 = vmatprep.subr.bf16.mxu0 0
  %2059 = vmatpush1.bf16.msra.mxu0 0
  %2060 = vmatprep.subr.bf16.mxu0 0
  %2061 = vmatpush1.bf16.msra.mxu0 0
  %2062 = vmatprep.subr.bf16.mxu0 0
  %2063 = vmatpush1.bf16.msra.mxu0 0
  %2064 = vmatprep.subr.bf16.mxu0 0
  %2065 = vmatpush1.bf16.msra.mxu0 0
  %2066 = vmatprep.subr.bf16.mxu0 0
  %2067 = vmatpush1.bf16.msra.mxu0 0
  %2068 = vmatprep.subr.bf16.mxu0 0
  %2069 = vmatpush1.bf16.msra.mxu0 0
  %2070 = vmatprep.subr.bf16.mxu0 0
  %2071 = vmatpush1.bf16.msra.mxu0 0
  %2072 = vmatprep.subr.bf16.mxu0 0
  %2073 = vmatpush1.bf16.msra.mxu0 0
  %2074 = vmatprep.subr.bf16.mxu0 0
  %2075 = vmatpush1.bf16.msra.mxu0 0
  %2076 = vmatprep.subr.bf16.mxu0 0
  %2077 = vmatpush1.bf16.msra.mxu0 0
  %2078 = vmatprep.subr.bf16.mxu0 0
  %2079 = vmatpush1.bf16.msra.mxu0 0
  %2080 = vmatprep.subr.bf16.mxu0 0
  %2081 = vmatpush1.bf16.msra.mxu0 0
  %2082 = vmatprep.subr.bf16.mxu0 0
  %2083 = vmatpush1.bf16.msra.mxu0 0
  %2084 = vmatprep.subr.bf16.mxu0 0
  %2085 = vmatpush1.bf16.msra.mxu0 0
  %2086 = vmatprep.mubr.bf16.mxu0 0
  %2087 = vmatmul.mubr.bf16.gmra.mrb[0].mxu0 %v2052
  %v2088 = vpop.f32.mrb[0].mxu0
  %v2089 = vadd.f32 0.0, %v2088
  %v2090 = vpop.f32.mrb[0].mxu0
  %v2091 = vpop.f32.mrb[0].mxu0
  %v2092 = vadd.f32 0.0, %v2091
  %v2093 = vpop.f32.mrb[0].mxu0
  %2094 = vdwg.mxu0
  %v2095 = vpack.c.bf16 %v2037, %v2034
  %v2096 = vpack.c.bf16 %v2092, %v2089
  %v2099 = vunpack.c.l.b16 %v1869
  %v2100 = vunpack.c.l.b16 %v1870
  %v2101 = vpack.c.b16 %v2100, %v2099
  %v2104 = vsel %vm59, %v1983, 0
  %2106 = vmatprep.subr.bf16.mxu0 0
  %2107 = vmatpush1.bf16.msra.mxu0 %v2101
  %2108 = vmatprep.subr.bf16.mxu0 0
  %2109 = vmatpush1.bf16.msra.mxu0 0
  %2110 = vmatprep.subr.bf16.mxu0 0
  %2111 = vmatpush1.bf16.msra.mxu0 0
  %2112 = vmatprep.subr.bf16.mxu0 0
  %2113 = vmatpush1.bf16.msra.mxu0 0
  %2114 = vmatprep.subr.bf16.mxu0 0
  %2115 = vmatpush1.bf16.msra.mxu0 0
  %2116 = vmatprep.subr.bf16.mxu0 0
  %2117 = vmatpush1.bf16.msra.mxu0 0
  %2118 = vmatprep.subr.bf16.mxu0 0
  %2119 = vmatpush1.bf16.msra.mxu0 0
  %2120 = vmatprep.subr.bf16.mxu0 0
  %2121 = vmatpush1.bf16.msra.mxu0 0
  %2122 = vmatprep.subr.bf16.mxu0 0
  %2123 = vmatpush1.bf16.msra.mxu0 0
  %2124 = vmatprep.subr.bf16.mxu0 0
  %2125 = vmatpush1.bf16.msra.mxu0 0
  %2126 = vmatprep.subr.bf16.mxu0 0
  %2127 = vmatpush1.bf16.msra.mxu0 0
  %2128 = vmatprep.subr.bf16.mxu0 0
  %2129 = vmatpush1.bf16.msra.mxu0 0
  %2130 = vmatprep.subr.bf16.mxu0 0
  %2131 = vmatpush1.bf16.msra.mxu0 0
  %2132 = vmatprep.subr.bf16.mxu0 0
  %2133 = vmatpush1.bf16.msra.mxu0 0
  %2134 = vmatprep.subr.bf16.mxu0 0
  %2135 = vmatpush1.bf16.msra.mxu0 0
  %2136 = vmatprep.subr.bf16.mxu0 0
  %2137 = vmatpush1.bf16.msra.mxu0 0
  %2138 = vmatprep.mubr.bf16.mxu0 0
  %2139 = vmatmul.mubr.bf16.gmra.mrb[0].mxu0 %v2104
  %v2140 = vpop.f32.mrb[0].mxu0
  %v2141 = vadd.f32 0.0, %v2140
  %v2142 = vpop.f32.mrb[0].mxu0
  %v2143 = vpop.f32.mrb[0].mxu0
  %v2144 = vadd.f32 0.0, %v2143
  %v2145 = vpop.f32.mrb[0].mxu0
  %2146 = vdwg.mxu0
  %v2149 = vunpack.c.l.b16 %v1871
  %v2150 = vunpack.c.l.b16 %v1872
  %v2151 = vpack.c.b16 %v2150, %v2149
  %v2154 = vsel %vm59, %v1984, 0
  %2156 = vmatprep.subr.bf16.mxu0 0
  %2157 = vmatpush1.bf16.msra.mxu0 %v2151
  %2158 = vmatprep.subr.bf16.mxu0 0
  %2159 = vmatpush1.bf16.msra.mxu0 0
  %2160 = vmatprep.subr.bf16.mxu0 0
  %2161 = vmatpush1.bf16.msra.mxu0 0
  %2162 = vmatprep.subr.bf16.mxu0 0
  %2163 = vmatpush1.bf16.msra.mxu0 0
  %2164 = vmatprep.subr.bf16.mxu0 0
  %2165 = vmatpush1.bf16.msra.mxu0 0
  %2166 = vmatprep.subr.bf16.mxu0 0
  %2167 = vmatpush1.bf16.msra.mxu0 0
  %2168 = vmatprep.subr.bf16.mxu0 0
  %2169 = vmatpush1.bf16.msra.mxu0 0
  %2170 = vmatprep.subr.bf16.mxu0 0
  %2171 = vmatpush1.bf16.msra.mxu0 0
  %2172 = vmatprep.subr.bf16.mxu0 0
  %2173 = vmatpush1.bf16.msra.mxu0 0
  %2174 = vmatprep.subr.bf16.mxu0 0
  %2175 = vmatpush1.bf16.msra.mxu0 0
  %2176 = vmatprep.subr.bf16.mxu0 0
  %2177 = vmatpush1.bf16.msra.mxu0 0
  %2178 = vmatprep.subr.bf16.mxu0 0
  %2179 = vmatpush1.bf16.msra.mxu0 0
  %2180 = vmatprep.subr.bf16.mxu0 0
  %2181 = vmatpush1.bf16.msra.mxu0 0
  %2182 = vmatprep.subr.bf16.mxu0 0
  %2183 = vmatpush1.bf16.msra.mxu0 0
  %2184 = vmatprep.subr.bf16.mxu0 0
  %2185 = vmatpush1.bf16.msra.mxu0 0
  %2186 = vmatprep.subr.bf16.mxu0 0
  %2187 = vmatpush1.bf16.msra.mxu0 0
  %2188 = vmatprep.mubr.bf16.mxu0 0
  %2189 = vmatmul.mubr.bf16.gmra.mrb[0].mxu0 %v2154
  %v2190 = vpop.f32.mrb[0].mxu0
  %v2191 = vadd.f32 0.0, %v2190
  %v2192 = vpop.f32.mrb[0].mxu0
  %v2193 = vpop.f32.mrb[0].mxu0
  %v2194 = vadd.f32 0.0, %v2193
  %v2195 = vpop.f32.mrb[0].mxu0
  %2196 = vdwg.mxu0
  %v2197 = vpack.c.bf16 %v2144, %v2141
  %v2198 = vpack.c.bf16 %v2194, %v2191
  %v2200 = vsel %vm59, %v2197, 0
  %2202 = vmatprep.subr.bf16.mxu0 0
  %2203 = vmatpush1.bf16.msra.mxu0 %v2095
  %2204 = vmatprep.subr.bf16.mxu0 0
  %2205 = vmatpush1.bf16.msra.mxu0 0
  %2206 = vmatprep.subr.bf16.mxu0 0
  %2207 = vmatpush1.bf16.msra.mxu0 0
  %2208 = vmatprep.subr.bf16.mxu0 0
  %2209 = vmatpush1.bf16.msra.mxu0 0
  %2210 = vmatprep.subr.bf16.mxu0 0
  %2211 = vmatpush1.bf16.msra.mxu0 0
  %2212 = vmatprep.subr.bf16.mxu0 0
  %2213 = vmatpush1.bf16.msra.mxu0 0
  %2214 = vmatprep.subr.bf16.mxu0 0
  %2215 = vmatpush1.bf16.msra.mxu0 0
  %2216 = vmatprep.subr.bf16.mxu0 0
  %2217 = vmatpush1.bf16.msra.mxu0 0
  %2218 = vmatprep.subr.bf16.mxu0 0
  %2219 = vmatpush1.bf16.msra.mxu0 0
  %2220 = vmatprep.subr.bf16.mxu0 0
  %2221 = vmatpush1.bf16.msra.mxu0 0
  %2222 = vmatprep.subr.bf16.mxu0 0
  %2223 = vmatpush1.bf16.msra.mxu0 0
  %2224 = vmatprep.subr.bf16.mxu0 0
  %2225 = vmatpush1.bf16.msra.mxu0 0
  %2226 = vmatprep.subr.bf16.mxu0 0
  %2227 = vmatpush1.bf16.msra.mxu0 0
  %2228 = vmatprep.subr.bf16.mxu0 0
  %2229 = vmatpush1.bf16.msra.mxu0 0
  %2230 = vmatprep.subr.bf16.mxu0 0
  %2231 = vmatpush1.bf16.msra.mxu0 0
  %2232 = vmatprep.subr.bf16.mxu0 0
  %2233 = vmatpush1.bf16.msra.mxu0 0
  %2234 = vmatprep.mubr.bf16.mxu0 0
  %2235 = vmatmul.mubr.bf16.gmra.mrb[0].mxu0 %v2200
  %v2236 = vpop.f32.mrb[0].mxu0
  %v2237 = vadd.f32 0.0, %v2236
  %v2238 = vpop.f32.mrb[0].mxu0
  %v2239 = vpop.f32.mrb[0].mxu0
  %v2240 = vadd.f32 0.0, %v2239
  %v2241 = vpop.f32.mrb[0].mxu0
  %2242 = vdwg.mxu0
  %v2244 = vsel %vm59, %v2198, 0
  %2246 = vmatprep.subr.bf16.mxu0 0
  %2247 = vmatpush1.bf16.msra.mxu0 %v2096
  %2248 = vmatprep.subr.bf16.mxu0 0
  %2249 = vmatpush1.bf16.msra.mxu0 0
  %2250 = vmatprep.subr.bf16.mxu0 0
  %2251 = vmatpush1.bf16.msra.mxu0 0
  %2252 = vmatprep.subr.bf16.mxu0 0
  %2253 = vmatpush1.bf16.msra.mxu0 0
  %2254 = vmatprep.subr.bf16.mxu0 0
  %2255 = vmatpush1.bf16.msra.mxu0 0
  %2256 = vmatprep.subr.bf16.mxu0 0
  %2257 = vmatpush1.bf16.msra.mxu0 0
  %2258 = vmatprep.subr.bf16.mxu0 0
  %2259 = vmatpush1.bf16.msra.mxu0 0
  %2260 = vmatprep.subr.bf16.mxu0 0
  %2261 = vmatpush1.bf16.msra.mxu0 0
  %2262 = vmatprep.subr.bf16.mxu0 0
  %2263 = vmatpush1.bf16.msra.mxu0 0
  %2264 = vmatprep.subr.bf16.mxu0 0
  %2265 = vmatpush1.bf16.msra.mxu0 0
  %2266 = vmatprep.subr.bf16.mxu0 0
  %2267 = vmatpush1.bf16.msra.mxu0 0
  %2268 = vmatprep.subr.bf16.mxu0 0
  %2269 = vmatpush1.bf16.msra.mxu0 0
  %2270 = vmatprep.subr.bf16.mxu0 0
  %2271 = vmatpush1.bf16.msra.mxu0 0
  %2272 = vmatprep.subr.bf16.mxu0 0
  %2273 = vmatpush1.bf16.msra.mxu0 0
  %2274 = vmatprep.subr.bf16.mxu0 0
  %2275 = vmatpush1.bf16.msra.mxu0 0
  %2276 = vmatprep.subr.bf16.mxu0 0
  %2277 = vmatpush1.bf16.msra.mxu0 0
  %2278 = vmatprep.mubr.bf16.mxu0 0
  %2279 = vmatmul.mubr.bf16.gmra.mrb[0].mxu0 %v2244
  %v2280 = vpop.f32.mrb[0].mxu0
  %v2281 = vadd.f32 0.0, %v2280
  %v2282 = vpop.f32.mrb[0].mxu0
  %v2283 = vpop.f32.mrb[0].mxu0
  %v2284 = vadd.f32 0.0, %v2283
  %v2285 = vpop.f32.mrb[0].mxu0
  %2286 = vdwg.mxu0
  %vm2287 = vcmp.gt.f32.partialorder %v2237, 0.0
  %vm2288 = vcmp.gt.f32.partialorder %v2240, 0.0
  %vm2289 = vcmp.gt.f32.partialorder %v2281, 0.0
  %vm2290 = vcmp.gt.f32.partialorder %v2284, 0.0
  %v2291 = vmul.f32 %v2237, 0.2
  %v2292 = vmul.f32 %v2240, 0.2
  %v2293 = vmul.f32 %v2281, 0.2
  %v2294 = vmul.f32 %v2284, 0.2
  %v2295 = vsel %vm2287, %v2237, %v2291
  %v2296 = vsel %vm2288, %v2240, %v2292
  %v2297 = vsel %vm2289, %v2281, %v2293
  %v2298 = vsel %vm2290, %v2284, %v2294
  %v2299 = vadd.f32 %v2295, %v26
  %v2300 = vadd.f32 %v2296, %v27
  %v2301 = vadd.f32 %v2297, %v26
  %v2302 = vadd.f32 %v2298, %v27
  %v2303 = vsel %vm59, %v2299, -inf
  %2304 = vmax.xlane.f32.xlu0 %v2303
  %v2305 = vpop.xlane.xlu0 %2304
  %v2306 = vsel %vm59, %v2300, -inf
  %2307 = vmax.xlane.f32.xlu0 %v2306
  %v2308 = vpop.xlane.xlu0 %2307
  %v2309 = vsel %vm59, %v2301, -inf
  %2310 = vmax.xlane.f32.xlu0 %v2309
  %v2311 = vpop.xlane.xlu0 %2310
  %v2312 = vsel %vm59, %v2302, -inf
  %2313 = vmax.xlane.f32.xlu0 %v2312
  %v2314 = vpop.xlane.xlu0 %2313
  %v2315 = vsub.f32 %v2299, %v2305
  %v2316 = vsub.f32 %v2300, %v2308
  %v2317 = vsub.f32 %v2301, %v2311
  %v2318 = vsub.f32 %v2302, %v2314
  %v2319 = vmul.f32 %v2315, 1.442695
  %v2320 = vpow.pop %v2319
  %v2321 = vmul.f32 %v2316, 1.442695
  %v2322 = vpow.pop %v2321
  %v2323 = vmul.f32 %v2317, 1.442695
  %v2324 = vpow.pop %v2323
  %v2325 = vmul.f32 %v2318, 1.442695
  %v2326 = vpow.pop %v2325
  %v2327 = vsel %vm59, %v2320, 0.0
  %2328 = vadd.xlane.f32.xlu0 %v2327
  %v2329 = vpop.xlane.xlu0 %2328
  %v2330 = vsel %vm59, %v2322, 0.0
  %2331 = vadd.xlane.f32.xlu0 %v2330
  %v2332 = vpop.xlane.xlu0 %2331
  %v2333 = vsel %vm59, %v2324, 0.0
  %2334 = vadd.xlane.f32.xlu0 %v2333
  %v2335 = vpop.xlane.xlu0 %2334
  %v2336 = vsel %vm59, %v2326, 0.0
  %2337 = vadd.xlane.f32.xlu0 %v2336
  %v2338 = vpop.xlane.xlu0 %2337
  %v2339 = vrcp.pop %v2329
  %v2340 = vrcp.pop %v2332
  %v2341 = vrcp.pop %v2335
  %v2342 = vrcp.pop %v2338
  %v2343 = vmul.f32 %v2320, %v2339
  %v2344 = vmul.f32 %v2322, %v2340
  %v2345 = vmul.f32 %v2324, %v2341
  %v2346 = vmul.f32 %v2326, %v2342
  %v2347 = vpack.c.bf16 %v2344, %v2343
  %v2348 = vpack.c.bf16 %v2346, %v2345
  %v2350 = vsel %vm59, %v2347, 0
  %2352 = vmatprep.subr.bf16.mxu0 0
  %2353 = vmatpush1.bf16.msra.mxu0 %v1983
  %2354 = vmatprep.subr.bf16.mxu0 0
  %2355 = vmatpush1.bf16.msra.mxu0 0
  %2356 = vmatprep.subr.bf16.mxu0 0
  %2357 = vmatpush1.bf16.msra.mxu0 0
  %2358 = vmatprep.subr.bf16.mxu0 0
  %2359 = vmatpush1.bf16.msra.mxu0 0
  %2360 = vmatprep.subr.bf16.mxu0 0
  %2361 = vmatpush1.bf16.msra.mxu0 0
  %2362 = vmatprep.subr.bf16.mxu0 0
  %2363 = vmatpush1.bf16.msra.mxu0 0
  %2364 = vmatprep.subr.bf16.mxu0 0
  %2365 = vmatpush1.bf16.msra.mxu0 0
  %2366 = vmatprep.subr.bf16.mxu0 0
  %2367 = vmatpush1.bf16.msra.mxu0 0
  %2368 = vmatprep.subr.bf16.mxu0 0
  %2369 = vmatpush1.bf16.msra.mxu0 0
  %2370 = vmatprep.subr.bf16.mxu0 0
  %2371 = vmatpush1.bf16.msra.mxu0 0
  %2372 = vmatprep.subr.bf16.mxu0 0
  %2373 = vmatpush1.bf16.msra.mxu0 0
  %2374 = vmatprep.subr.bf16.mxu0 0
  %2375 = vmatpush1.bf16.msra.mxu0 0
  %2376 = vmatprep.subr.bf16.mxu0 0
  %2377 = vmatpush1.bf16.msra.mxu0 0
  %2378 = vmatprep.subr.bf16.mxu0 0
  %2379 = vmatpush1.bf16.msra.mxu0 0
  %2380 = vmatprep.subr.bf16.mxu0 0
  %2381 = vmatpush1.bf16.msra.mxu0 0
  %2382 = vmatprep.subr.bf16.mxu0 0
  %2383 = vmatpush1.bf16.msra.mxu0 0
  %2384 = vmatprep.mubr.bf16.mxu0 0
  %2385 = vmatmul.mubr.bf16.gmra.mrb[0].mxu0 %v2350
  %v2386 = vpop.f32.mrb[0].mxu0
  %v2387 = vadd.f32 0.0, %v2386
  %v2388 = vpop.f32.mrb[0].mxu0
  %v2389 = vpop.f32.mrb[0].mxu0
  %v2390 = vadd.f32 0.0, %v2389
  %v2391 = vpop.f32.mrb[0].mxu0
  %2392 = vdwg.mxu0
  %v2394 = vsel %vm59, %v2348, 0
  %2396 = vmatprep.subr.bf16.mxu0 0
  %2397 = vmatpush1.bf16.msra.mxu0 %v1984
  %2398 = vmatprep.subr.bf16.mxu0 0
  %2399 = vmatpush1.bf16.msra.mxu0 0
  %2400 = vmatprep.subr.bf16.mxu0 0
  %2401 = vmatpush1.bf16.msra.mxu0 0
  %2402 = vmatprep.subr.bf16.mxu0 0
  %2403 = vmatpush1.bf16.msra.mxu0 0
  %2404 = vmatprep.subr.bf16.mxu0 0
  %2405 = vmatpush1.bf16.msra.mxu0 0
  %2406 = vmatprep.subr.bf16.mxu0 0
  %2407 = vmatpush1.bf16.msra.mxu0 0
  %2408 = vmatprep.subr.bf16.mxu0 0
  %2409 = vmatpush1.bf16.msra.mxu0 0
  %2410 = vmatprep.subr.bf16.mxu0 0
  %2411 = vmatpush1.bf16.msra.mxu0 0
  %2412 = vmatprep.subr.bf16.mxu0 0
  %2413 = vmatpush1.bf16.msra.mxu0 0
  %2414 = vmatprep.subr.bf16.mxu0 0
  %2415 = vmatpush1.bf16.msra.mxu0 0
  %2416 = vmatprep.subr.bf16.mxu0 0
  %2417 = vmatpush1.bf16.msra.mxu0 0
  %2418 = vmatprep.subr.bf16.mxu0 0
  %2419 = vmatpush1.bf16.msra.mxu0 0
  %2420 = vmatprep.subr.bf16.mxu0 0
  %2421 = vmatpush1.bf16.msra.mxu0 0
  %2422 = vmatprep.subr.bf16.mxu0 0
  %2423 = vmatpush1.bf16.msra.mxu0 0
  %2424 = vmatprep.subr.bf16.mxu0 0
  %2425 = vmatpush1.bf16.msra.mxu0 0
  %2426 = vmatprep.subr.bf16.mxu0 0
  %2427 = vmatpush1.bf16.msra.mxu0 0
  %2428 = vmatprep.mubr.bf16.mxu0 0
  %2429 = vmatmul.mubr.bf16.gmra.mrb[0].mxu0 %v2394
  %v2430 = vpop.f32.mrb[0].mxu0
  %v2431 = vadd.f32 0.0, %v2430
  %v2432 = vpop.f32.mrb[0].mxu0
  %v2433 = vpop.f32.mrb[0].mxu0
  %v2434 = vadd.f32 0.0, %v2433
  %v2435 = vpop.f32.mrb[0].mxu0
  %2436 = vdwg.mxu0
  %2439 = vrot.lane.b32.xlu0 %v2387, 96
  %v2440 = vpop.permute.xlu0 %2439
  %2441 = vrot.lane.b32.xlu0 %v2390, 96
  %v2442 = vpop.permute.xlu0 %2441
  %vm2445 = vcmask 917248
  %2446 = vst.msk [vmem:[%s6] sm:$0xff] %vm2445, %v2440
  %2447 = vst.msk [vmem:[%s6 + $0x8] sm:$0xff] %vm2445, %v2442
  %2450 = vrot.lane.b32.xlu0 %v2431, 112
  %v2451 = vpop.permute.xlu0 %2450
  %2452 = vrot.lane.b32.xlu0 %v2434, 112
  %v2453 = vpop.permute.xlu0 %2452
  %vm2456 = vcmask 1048448
  %2457 = vst.msk [vmem:[%s6] sm:$0xff] %vm2456, %v2451
  %2458 = vst.msk [vmem:[%s6 + $0x8] sm:$0xff] %vm2456, %v2453
  // Predicated region
  $region26: #{spatial_gat_forward.1} parent=0 // pred_check
    _
  $region27: #{spatial_gat_forward.1} parent=0 // pred_check_branch
    %2460 = sbr.rel (0) target = $region29
  $region28: #{spatial_gat_forward.1} parent=0 // pred_region
    _
  $region29: #{spatial_gat_forward.1} parent=0 // pred_fallthru
    _
  // Predicated region
  $region30: #{spatial_gat_forward.1} parent=0 // pred_check
    _
  $region31: #{spatial_gat_forward.1} parent=0 // pred_check_branch
    %2462 = sbr.rel (0) target = $region33
  $region32: #{spatial_gat_forward.1} parent=0 // pred_region
    _
  $region33: #{spatial_gat_forward.1} parent=0 // pred_fallthru
    _

</llo_original>
